<compile_context>
chip_gen: v6e
topology: v6e:2x2x1
jax: 0.10.0
libtpu: 0.0.40
codegen_flags: <defaults>
</compile_context>

<pallas_src>
import functools

import jax
import jax.numpy as jnp
from jax import lax
from jax.experimental import pallas as pl
from jax.experimental.pallas import tpu as pltpu

D_MODEL = 32
NHEAD = 4
D_FF = 64
EPS = 1e-5   # nn.LayerNorm default


# ----------------------------- Pallas kernel --------------------------------
def encoder_layer_kernel(x_ref, cond_ref, edge_ref,
                         wqkv_ref, bqkv_ref, wo_ref, bo_ref,
                         ln1_g_ref, ln1_b_ref,
                         w1_ref, b1_ref, w2_ref, b2_ref,
                         out_ref, *, B, T):
    D = D_MODEL
    H = NHEAD
    dh = D // H
    scale = 1.0 / (dh ** 0.5)
    BT = B * T

    x = x_ref[...]          # (B*T, D)
    cond = cond_ref[...]    # (B*T, 2D)

    # ---- multi-head self attention (batch_first, eval mode) ----
    qkv = jnp.dot(x, wqkv_ref[...], preferred_element_type=jnp.float32) + bqkv_ref[...]
    q = qkv[:, :D]
    k = qkv[:, D:2 * D]
    v = qkv[:, 2 * D:]

    # Scores for every (batch, head) pair stacked along sublanes -> one softmax.
    s_blocks = []
    for b in range(B):
        rs = slice(b * T, (b + 1) * T)
        for h in range(H):
            cs = slice(h * dh, (h + 1) * dh)
            s_blocks.append(jnp.dot(q[rs, cs], k[rs, cs].T,
                                    preferred_element_type=jnp.float32))
    s = jnp.concatenate(s_blocks, axis=0) * scale            # (B*H*T, T)
    s = s - jnp.max(s, axis=-1, keepdims=True)
    p = jnp.exp(s)
    p = p * pl.reciprocal(jnp.sum(p, axis=-1, keepdims=True), approx=True)

    # Weighted sums; heads merged back on lanes, batches on sublanes.
    o_rows = []
    for b in range(B):
        rs = slice(b * T, (b + 1) * T)
        heads = []
        for h in range(H):
            g = b * H + h
            cs = slice(h * dh, (h + 1) * dh)
            heads.append(jnp.dot(p[g * T:(g + 1) * T, :], v[rs, cs],
                                 preferred_element_type=jnp.float32))
        o_rows.append(jnp.concatenate(heads, axis=-1))        # (T, D)
    o = jnp.concatenate(o_rows, axis=0)                       # (B*T, D)

    # Single output projection for all batches / heads.
    attn = jnp.dot(o, wo_ref[...], preferred_element_type=jnp.float32) + bo_ref[...]

    # ---- residual + LayerNorm (affine) ----
    h1 = x + attn
    mu = jnp.mean(h1, axis=-1, keepdims=True)
    var = jnp.mean(jnp.square(h1 - mu), axis=-1, keepdims=True)
    h1 = (h1 - mu) * lax.rsqrt(var + EPS) * ln1_g_ref[...] + ln1_b_ref[...]

    # ---- ConvFeedForward: Conv1d(k=3,pad=1) -> ReLU -> Conv1d(k=3,pad=1) ----
    # Per-batch boundary masks (hoisted to the wrapper, reused by both convs):
    #   keep_prev zeroes the wrapped row at t==0, keep_next at t==T-1.
    keep_prev = edge_ref[:, 0:1]                              # (B*T, 1)
    keep_next = edge_ref[:, 1:2]                              # (B*T, 1)

    def conv1d_k3(inp, w_flat_ref, b_row):
        # Fuse the 3 taps into one matmul: cat([x_{t-1}, x_t, x_{t+1}]) @ W
        prev = pltpu.roll(inp, 1, 0) * keep_prev              # x[t-1]
        nxt = pltpu.roll(inp, BT - 1, 0) * keep_next          # x[t+1]
        cat = jnp.concatenate([prev, inp, nxt], axis=-1)      # (B*T, 3*Cin)
        return jnp.dot(cat, w_flat_ref[...],
                       preferred_element_type=jnp.float32) + b_row

    f = conv1d_k3(h1, w1_ref, b1_ref[...])
    f = jnp.maximum(f, 0.0)
    f = conv1d_k3(f, w2_ref, b2_ref[...])

    # ---- residual + CondLayerNorm (no affine, FiLM from cond) ----
    h2 = h1 + f
    mu2 = jnp.mean(h2, axis=-1, keepdims=True)
    var2 = jnp.mean(jnp.square(h2 - mu2), axis=-1, keepdims=True)
    hn = (h2 - mu2) * lax.rsqrt(var2 + EPS)
    gamma = cond[:, :D]
    beta = cond[:, D:]
    out_ref[...] = hn * (1.0 + gamma) + beta


# ------------------------------- wrapper -------------------------------------
def custom_transformer_encoder_layer(x, cond, params):
    B, T, D = x.shape
    F = params["conv1_b"].shape[0]

    # Flatten batch onto sublanes: one kernel invocation for the whole problem.
    x2 = x.reshape(B * T, D)
    cond2 = cond.reshape(B * T, 2 * D)

    # Per-batch conv boundary masks (computed once, outside the kernel).
    t_in_b = jnp.arange(B * T) % T
    edge = jnp.stack([(t_in_b != 0).astype(x.dtype),
                      (t_in_b != T - 1).astype(x.dtype)], axis=-1)   # (B*T, 2)

    # Re-layout parameters so the kernel never transposes big operands.
    wqkv_t = params["in_proj_w"].T                        # (D, 3D)
    bqkv = params["in_proj_b"].reshape(1, 3 * D)
    wo_t = params["out_proj_w"].T                         # (D, D)
    bo = params["out_proj_b"].reshape(1, D)
    ln1_g = params["ln1_g"].reshape(1, D)
    ln1_b = params["ln1_b"].reshape(1, D)
    # Conv weights flattened to (3*Cin, Cout): row k*Cin+i == w[o, i, k].
    w1_flat = jnp.transpose(params["conv1_w"], (2, 1, 0)).reshape(3 * D, F)
    b1 = params["conv1_b"].reshape(1, F)
    w2_flat = jnp.transpose(params["conv2_w"], (2, 1, 0)).reshape(3 * F, D)
    b2 = params["conv2_b"].reshape(1, D)

    vm = pl.BlockSpec(memory_space=pltpu.MemorySpace.VMEM)   # whole array in VMEM
    out2 = pl.pallas_call(
        functools.partial(encoder_layer_kernel, B=B, T=T),
        out_shape=jax.ShapeDtypeStruct((B * T, D), x.dtype),
        in_specs=[vm] * 13,
        out_specs=vm,
    )(x2, cond2, edge, wqkv_t, bqkv, wo_t, bo, ln1_g, ln1_b,
      w1_flat, b1, w2_flat, b2)
    return out2.reshape(B, T, D)


# -------------------------- pure-JAX reference --------------------------------
def reference(x, cond, params):
    B, T, D = x.shape
    dh = D // NHEAD
    qkv = x @ params["in_proj_w"].T + params["in_proj_b"]
    q, k, v = jnp.split(qkv, 3, axis=-1)
    qh = q.reshape(B, T, NHEAD, dh).transpose(0, 2, 1, 3)
    kh = k.reshape(B, T, NHEAD, dh).transpose(0, 2, 1, 3)
    vh = v.reshape(B, T, NHEAD, dh).transpose(0, 2, 1, 3)
    s = jnp.einsum("bhqd,bhkd->bhqk", qh, kh) / jnp.sqrt(float(dh))
    p = jax.nn.softmax(s, axis=-1)
    o = jnp.einsum("bhqk,bhkd->bhqd", p, vh).transpose(0, 2, 1, 3).reshape(B, T, D)
    attn = o @ params["out_proj_w"].T + params["out_proj_b"]
    h1 = x + attn
    mu = h1.mean(-1, keepdims=True)
    var = ((h1 - mu) ** 2).mean(-1, keepdims=True)
    h1 = (h1 - mu) / jnp.sqrt(var + EPS) * params["ln1_g"] + params["ln1_b"]
    xt = h1.transpose(0, 2, 1)                              # [B, D, T]
    f = lax.conv_general_dilated(xt, params["conv1_w"], (1,), "SAME",
                                 dimension_numbers=("NCH", "OIH", "NCH"))
    f = f + params["conv1_b"][None, :, None]
    f = jnp.maximum(f, 0.0)
    f = lax.conv_general_dilated(f, params["conv2_w"], (1,), "SAME",
                                 dimension_numbers=("NCH", "OIH", "NCH"))
    f = f + params["conv2_b"][None, :, None]
    h2 = h1 + f.transpose(0, 2, 1)
    mu2 = h2.mean(-1, keepdims=True)
    var2 = ((h2 - mu2) ** 2).mean(-1, keepdims=True)
    hn = (h2 - mu2) / jnp.sqrt(var2 + EPS)
    gamma, beta = jnp.split(cond, 2, axis=-1)
    return hn * (1.0 + gamma) + beta


# ------------------------------ params ----------------------------------------
def init_params(key):
    ks = jax.random.split(key, 10)

    def w(k, shape, scale=0.05):
        return scale * jax.random.normal(k, shape, jnp.float32)

    return dict(
        in_proj_w=w(ks[0], (3 * D_MODEL, D_MODEL)),
        in_proj_b=w(ks[1], (3 * D_MODEL,)),
        out_proj_w=w(ks[2], (D_MODEL, D_MODEL)),
        out_proj_b=w(ks[3], (D_MODEL,)),
        ln1_g=1.0 + w(ks[4], (D_MODEL,)),
        ln1_b=w(ks[5], (D_MODEL,)),
        conv1_w=w(ks[6], (D_FF, D_MODEL, 3)),     # PyTorch Conv1d: (out, in, k)
        conv1_b=w(ks[7], (D_FF,)),
        conv2_w=w(ks[8], (D_MODEL, D_FF, 3)),
        conv2_b=w(ks[9], (D_MODEL,)),
    )


if __name__ == "__main__":
    key = jax.random.PRNGKey(0)
    kx, kc, kp = jax.random.split(key, 3)
    B, T = 2, 8
    x = jax.random.normal(kx, (B, T, D_MODEL), jnp.float32)
    cond = jax.random.normal(kc, (B, T, 2 * D_MODEL), jnp.float32)
    params = init_params(kp)

    out = jax.block_until_ready(custom_transformer_encoder_layer(x, cond, params))
    assert out.shape == (B, T, D_MODEL)

    ref = jax.block_until_ready(reference(x, cond, params))
    err = float(jnp.max(jnp.abs(out - ref)))
    assert err < 1e-3, f"max abs err {err}"
    print("KERNEL_OK")
</pallas_src>

<mosaic_0001>
module attributes {stable_mosaic.version = 11 : i64} {
  func.func @encoder_layer_kernel(%arg0: memref<16x32xf32, #tpu.memory_space<vmem>>, %arg1: memref<16x64xf32, #tpu.memory_space<vmem>>, %arg2: memref<16x2xf32, #tpu.memory_space<vmem>>, %arg3: memref<32x96xf32, #tpu.memory_space<vmem>>, %arg4: memref<1x96xf32, #tpu.memory_space<vmem>>, %arg5: memref<32x32xf32, #tpu.memory_space<vmem>>, %arg6: memref<1x32xf32, #tpu.memory_space<vmem>>, %arg7: memref<1x32xf32, #tpu.memory_space<vmem>>, %arg8: memref<1x32xf32, #tpu.memory_space<vmem>>, %arg9: memref<96x64xf32, #tpu.memory_space<vmem>>, %arg10: memref<1x64xf32, #tpu.memory_space<vmem>>, %arg11: memref<192x32xf32, #tpu.memory_space<vmem>>, %arg12: memref<1x32xf32, #tpu.memory_space<vmem>>, %arg13: memref<16x32xf32, #tpu.memory_space<vmem>>) attributes {dimension_semantics = [], scalar_prefetch = 0 : i64, scratch_operands = 0 : i64, tpu.core_type = #tpu.core_type<tc>} {
    %c0 = arith.constant 0 : index
    %c0_0 = arith.constant 0 : index
    %0 = vector.load %arg0[%c0, %c0_0] : memref<16x32xf32, #tpu.memory_space<vmem>>, vector<16x32xf32>
    %c0_1 = arith.constant 0 : index
    %c0_2 = arith.constant 0 : index
    %1 = vector.load %arg1[%c0_1, %c0_2] : memref<16x64xf32, #tpu.memory_space<vmem>>, vector<16x64xf32>
    %c0_3 = arith.constant 0 : index
    %c0_4 = arith.constant 0 : index
    %2 = vector.load %arg3[%c0_3, %c0_4] : memref<32x96xf32, #tpu.memory_space<vmem>>, vector<32x96xf32>
    %cst = arith.constant dense<0.000000e+00> : vector<16x96xf32>
    %3 = tpu.matmul %0, %2, %cst {dimension_numbers = #tpu.dot_dimension_numbers<[1], [0], [0], [1], [0, 0, 1, 1], [], []>} : vector<16x32xf32>, vector<32x96xf32>, vector<16x96xf32> -> vector<16x96xf32>
    %c0_5 = arith.constant 0 : index
    %c0_6 = arith.constant 0 : index
    %4 = vector.load %arg4[%c0_5, %c0_6] : memref<1x96xf32, #tpu.memory_space<vmem>>, vector<1x96xf32>
    %5 = vector.broadcast %4 : vector<1x96xf32> to vector<16x96xf32>
    %6 = arith.addf %3, %5 : vector<16x96xf32>
    %7 = vector.extract_strided_slice %6 {offsets = [0, 0], sizes = [16, 32], strides = [1, 1]} : vector<16x96xf32> to vector<16x32xf32>
    %8 = vector.extract_strided_slice %6 {offsets = [0, 32], sizes = [16, 32], strides = [1, 1]} : vector<16x96xf32> to vector<16x32xf32>
    %9 = vector.extract_strided_slice %6 {offsets = [0, 64], sizes = [16, 32], strides = [1, 1]} : vector<16x96xf32> to vector<16x32xf32>
    %10 = vector.extract_strided_slice %7 {offsets = [0, 0], sizes = [8, 8], strides = [1, 1]} : vector<16x32xf32> to vector<8x8xf32>
    %11 = vector.extract_strided_slice %8 {offsets = [0, 0], sizes = [8, 8], strides = [1, 1]} : vector<16x32xf32> to vector<8x8xf32>
    %12 = tpu.transpose %11, [1, 0] : vector<8x8xf32> -> vector<8x8xf32>
    %cst_7 = arith.constant dense<0.000000e+00> : vector<8x8xf32>
    %13 = tpu.matmul %10, %12, %cst_7 {dimension_numbers = #tpu.dot_dimension_numbers<[1], [0], [0], [1], [0, 0, 1, 1], [], []>} : vector<8x8xf32>, vector<8x8xf32>, vector<8x8xf32> -> vector<8x8xf32>
    %14 = vector.extract_strided_slice %7 {offsets = [0, 8], sizes = [8, 8], strides = [1, 1]} : vector<16x32xf32> to vector<8x8xf32>
    %15 = vector.extract_strided_slice %8 {offsets = [0, 8], sizes = [8, 8], strides = [1, 1]} : vector<16x32xf32> to vector<8x8xf32>
    %16 = tpu.transpose %15, [1, 0] : vector<8x8xf32> -> vector<8x8xf32>
    %cst_8 = arith.constant dense<0.000000e+00> : vector<8x8xf32>
    %17 = tpu.matmul %14, %16, %cst_8 {dimension_numbers = #tpu.dot_dimension_numbers<[1], [0], [0], [1], [0, 0, 1, 1], [], []>} : vector<8x8xf32>, vector<8x8xf32>, vector<8x8xf32> -> vector<8x8xf32>
    %18 = vector.extract_strided_slice %7 {offsets = [0, 16], sizes = [8, 8], strides = [1, 1]} : vector<16x32xf32> to vector<8x8xf32>
    %19 = vector.extract_strided_slice %8 {offsets = [0, 16], sizes = [8, 8], strides = [1, 1]} : vector<16x32xf32> to vector<8x8xf32>
    %20 = tpu.transpose %19, [1, 0] : vector<8x8xf32> -> vector<8x8xf32>
    %cst_9 = arith.constant dense<0.000000e+00> : vector<8x8xf32>
    %21 = tpu.matmul %18, %20, %cst_9 {dimension_numbers = #tpu.dot_dimension_numbers<[1], [0], [0], [1], [0, 0, 1, 1], [], []>} : vector<8x8xf32>, vector<8x8xf32>, vector<8x8xf32> -> vector<8x8xf32>
    %22 = vector.extract_strided_slice %7 {offsets = [0, 24], sizes = [8, 8], strides = [1, 1]} : vector<16x32xf32> to vector<8x8xf32>
    %23 = vector.extract_strided_slice %8 {offsets = [0, 24], sizes = [8, 8], strides = [1, 1]} : vector<16x32xf32> to vector<8x8xf32>
    %24 = tpu.transpose %23, [1, 0] : vector<8x8xf32> -> vector<8x8xf32>
    %cst_10 = arith.constant dense<0.000000e+00> : vector<8x8xf32>
    %25 = tpu.matmul %22, %24, %cst_10 {dimension_numbers = #tpu.dot_dimension_numbers<[1], [0], [0], [1], [0, 0, 1, 1], [], []>} : vector<8x8xf32>, vector<8x8xf32>, vector<8x8xf32> -> vector<8x8xf32>
    %26 = vector.extract_strided_slice %7 {offsets = [8, 0], sizes = [8, 8], strides = [1, 1]} : vector<16x32xf32> to vector<8x8xf32>
    %27 = vector.extract_strided_slice %8 {offsets = [8, 0], sizes = [8, 8], strides = [1, 1]} : vector<16x32xf32> to vector<8x8xf32>
    %28 = tpu.transpose %27, [1, 0] : vector<8x8xf32> -> vector<8x8xf32>
    %cst_11 = arith.constant dense<0.000000e+00> : vector<8x8xf32>
    %29 = tpu.matmul %26, %28, %cst_11 {dimension_numbers = #tpu.dot_dimension_numbers<[1], [0], [0], [1], [0, 0, 1, 1], [], []>} : vector<8x8xf32>, vector<8x8xf32>, vector<8x8xf32> -> vector<8x8xf32>
    %30 = vector.extract_strided_slice %7 {offsets = [8, 8], sizes = [8, 8], strides = [1, 1]} : vector<16x32xf32> to vector<8x8xf32>
    %31 = vector.extract_strided_slice %8 {offsets = [8, 8], sizes = [8, 8], strides = [1, 1]} : vector<16x32xf32> to vector<8x8xf32>
    %32 = tpu.transpose %31, [1, 0] : vector<8x8xf32> -> vector<8x8xf32>
    %cst_12 = arith.constant dense<0.000000e+00> : vector<8x8xf32>
    %33 = tpu.matmul %30, %32, %cst_12 {dimension_numbers = #tpu.dot_dimension_numbers<[1], [0], [0], [1], [0, 0, 1, 1], [], []>} : vector<8x8xf32>, vector<8x8xf32>, vector<8x8xf32> -> vector<8x8xf32>
    %34 = vector.extract_strided_slice %7 {offsets = [8, 16], sizes = [8, 8], strides = [1, 1]} : vector<16x32xf32> to vector<8x8xf32>
    %35 = vector.extract_strided_slice %8 {offsets = [8, 16], sizes = [8, 8], strides = [1, 1]} : vector<16x32xf32> to vector<8x8xf32>
    %36 = tpu.transpose %35, [1, 0] : vector<8x8xf32> -> vector<8x8xf32>
    %cst_13 = arith.constant dense<0.000000e+00> : vector<8x8xf32>
    %37 = tpu.matmul %34, %36, %cst_13 {dimension_numbers = #tpu.dot_dimension_numbers<[1], [0], [0], [1], [0, 0, 1, 1], [], []>} : vector<8x8xf32>, vector<8x8xf32>, vector<8x8xf32> -> vector<8x8xf32>
    %38 = vector.extract_strided_slice %7 {offsets = [8, 24], sizes = [8, 8], strides = [1, 1]} : vector<16x32xf32> to vector<8x8xf32>
    %39 = vector.extract_strided_slice %8 {offsets = [8, 24], sizes = [8, 8], strides = [1, 1]} : vector<16x32xf32> to vector<8x8xf32>
    %40 = tpu.transpose %39, [1, 0] : vector<8x8xf32> -> vector<8x8xf32>
    %cst_14 = arith.constant dense<0.000000e+00> : vector<8x8xf32>
    %41 = tpu.matmul %38, %40, %cst_14 {dimension_numbers = #tpu.dot_dimension_numbers<[1], [0], [0], [1], [0, 0, 1, 1], [], []>} : vector<8x8xf32>, vector<8x8xf32>, vector<8x8xf32> -> vector<8x8xf32>
    %42 = tpu.concatenate %13, %17, %21, %25, %29, %33, %37, %41 in 0 : vector<8x8xf32>, vector<8x8xf32>, vector<8x8xf32>, vector<8x8xf32>, vector<8x8xf32>, vector<8x8xf32>, vector<8x8xf32>, vector<8x8xf32> -> vector<64x8xf32>
    %cst_15 = arith.constant 0.353553385 : f32
    %43 = vector.broadcast %cst_15 : f32 to vector<64x8xf32>
    %44 = arith.mulf %42, %43 : vector<64x8xf32>
    %cst_16 = arith.constant dense<0xFF800000> : vector<64xf32>
    %45 = vector.multi_reduction <maximumf>, %44, %cst_16 [1] : vector<64x8xf32> to vector<64xf32>
    %46 = vector.shape_cast %45 : vector<64xf32> to vector<64x1xf32>
    %47 = vector.broadcast %46 : vector<64x1xf32> to vector<64x8xf32>
    %48 = arith.subf %44, %47 : vector<64x8xf32>
    %49 = math.exp %48 : vector<64x8xf32>
    %cst_17 = arith.constant dense<0.000000e+00> : vector<64xf32>
    %50 = vector.multi_reduction <add>, %49, %cst_17 [1] : vector<64x8xf32> to vector<64xf32>
    %51 = vector.shape_cast %50 : vector<64xf32> to vector<64x1xf32>
    %52 = tpu.reciprocal %51 {approx = true} : vector<64x1xf32> -> vector<64x1xf32>
    %53 = vector.broadcast %52 : vector<64x1xf32> to vector<64x8xf32>
    %54 = arith.mulf %49, %53 : vector<64x8xf32>
    %55 = vector.extract_strided_slice %54 {offsets = [0, 0], sizes = [8, 8], strides = [1, 1]} : vector<64x8xf32> to vector<8x8xf32>
    %56 = vector.extract_strided_slice %9 {offsets = [0, 0], sizes = [8, 8], strides = [1, 1]} : vector<16x32xf32> to vector<8x8xf32>
    %cst_18 = arith.constant dense<0.000000e+00> : vector<8x8xf32>
    %57 = tpu.matmul %55, %56, %cst_18 {dimension_numbers = #tpu.dot_dimension_numbers<[1], [0], [0], [1], [0, 0, 1, 1], [], []>} : vector<8x8xf32>, vector<8x8xf32>, vector<8x8xf32> -> vector<8x8xf32>
    %58 = vector.extract_strided_slice %54 {offsets = [8, 0], sizes = [8, 8], strides = [1, 1]} : vector<64x8xf32> to vector<8x8xf32>
    %59 = vector.extract_strided_slice %9 {offsets = [0, 8], sizes = [8, 8], strides = [1, 1]} : vector<16x32xf32> to vector<8x8xf32>
    %cst_19 = arith.constant dense<0.000000e+00> : vector<8x8xf32>
    %60 = tpu.matmul %58, %59, %cst_19 {dimension_numbers = #tpu.dot_dimension_numbers<[1], [0], [0], [1], [0, 0, 1, 1], [], []>} : vector<8x8xf32>, vector<8x8xf32>, vector<8x8xf32> -> vector<8x8xf32>
    %61 = vector.extract_strided_slice %54 {offsets = [16, 0], sizes = [8, 8], strides = [1, 1]} : vector<64x8xf32> to vector<8x8xf32>
    %62 = vector.extract_strided_slice %9 {offsets = [0, 16], sizes = [8, 8], strides = [1, 1]} : vector<16x32xf32> to vector<8x8xf32>
    %cst_20 = arith.constant dense<0.000000e+00> : vector<8x8xf32>
    %63 = tpu.matmul %61, %62, %cst_20 {dimension_numbers = #tpu.dot_dimension_numbers<[1], [0], [0], [1], [0, 0, 1, 1], [], []>} : vector<8x8xf32>, vector<8x8xf32>, vector<8x8xf32> -> vector<8x8xf32>
    %64 = vector.extract_strided_slice %54 {offsets = [24, 0], sizes = [8, 8], strides = [1, 1]} : vector<64x8xf32> to vector<8x8xf32>
    %65 = vector.extract_strided_slice %9 {offsets = [0, 24], sizes = [8, 8], strides = [1, 1]} : vector<16x32xf32> to vector<8x8xf32>
    %cst_21 = arith.constant dense<0.000000e+00> : vector<8x8xf32>
    %66 = tpu.matmul %64, %65, %cst_21 {dimension_numbers = #tpu.dot_dimension_numbers<[1], [0], [0], [1], [0, 0, 1, 1], [], []>} : vector<8x8xf32>, vector<8x8xf32>, vector<8x8xf32> -> vector<8x8xf32>
    %67 = tpu.concatenate %57, %60, %63, %66 in 1 : vector<8x8xf32>, vector<8x8xf32>, vector<8x8xf32>, vector<8x8xf32> -> vector<8x32xf32>
    %68 = vector.extract_strided_slice %54 {offsets = [32, 0], sizes = [8, 8], strides = [1, 1]} : vector<64x8xf32> to vector<8x8xf32>
    %69 = vector.extract_strided_slice %9 {offsets = [8, 0], sizes = [8, 8], strides = [1, 1]} : vector<16x32xf32> to vector<8x8xf32>
    %cst_22 = arith.constant dense<0.000000e+00> : vector<8x8xf32>
    %70 = tpu.matmul %68, %69, %cst_22 {dimension_numbers = #tpu.dot_dimension_numbers<[1], [0], [0], [1], [0, 0, 1, 1], [], []>} : vector<8x8xf32>, vector<8x8xf32>, vector<8x8xf32> -> vector<8x8xf32>
    %71 = vector.extract_strided_slice %54 {offsets = [40, 0], sizes = [8, 8], strides = [1, 1]} : vector<64x8xf32> to vector<8x8xf32>
    %72 = vector.extract_strided_slice %9 {offsets = [8, 8], sizes = [8, 8], strides = [1, 1]} : vector<16x32xf32> to vector<8x8xf32>
    %cst_23 = arith.constant dense<0.000000e+00> : vector<8x8xf32>
    %73 = tpu.matmul %71, %72, %cst_23 {dimension_numbers = #tpu.dot_dimension_numbers<[1], [0], [0], [1], [0, 0, 1, 1], [], []>} : vector<8x8xf32>, vector<8x8xf32>, vector<8x8xf32> -> vector<8x8xf32>
    %74 = vector.extract_strided_slice %54 {offsets = [48, 0], sizes = [8, 8], strides = [1, 1]} : vector<64x8xf32> to vector<8x8xf32>
    %75 = vector.extract_strided_slice %9 {offsets = [8, 16], sizes = [8, 8], strides = [1, 1]} : vector<16x32xf32> to vector<8x8xf32>
    %cst_24 = arith.constant dense<0.000000e+00> : vector<8x8xf32>
    %76 = tpu.matmul %74, %75, %cst_24 {dimension_numbers = #tpu.dot_dimension_numbers<[1], [0], [0], [1], [0, 0, 1, 1], [], []>} : vector<8x8xf32>, vector<8x8xf32>, vector<8x8xf32> -> vector<8x8xf32>
    %77 = vector.extract_strided_slice %54 {offsets = [56, 0], sizes = [8, 8], strides = [1, 1]} : vector<64x8xf32> to vector<8x8xf32>
    %78 = vector.extract_strided_slice %9 {offsets = [8, 24], sizes = [8, 8], strides = [1, 1]} : vector<16x32xf32> to vector<8x8xf32>
    %cst_25 = arith.constant dense<0.000000e+00> : vector<8x8xf32>
    %79 = tpu.matmul %77, %78, %cst_25 {dimension_numbers = #tpu.dot_dimension_numbers<[1], [0], [0], [1], [0, 0, 1, 1], [], []>} : vector<8x8xf32>, vector<8x8xf32>, vector<8x8xf32> -> vector<8x8xf32>
    %80 = tpu.concatenate %70, %73, %76, %79 in 1 : vector<8x8xf32>, vector<8x8xf32>, vector<8x8xf32>, vector<8x8xf32> -> vector<8x32xf32>
    %81 = tpu.concatenate %67, %80 in 0 : vector<8x32xf32>, vector<8x32xf32> -> vector<16x32xf32>
    %c0_26 = arith.constant 0 : index
    %c0_27 = arith.constant 0 : index
    %82 = vector.load %arg5[%c0_26, %c0_27] : memref<32x32xf32, #tpu.memory_space<vmem>>, vector<32x32xf32>
    %cst_28 = arith.constant dense<0.000000e+00> : vector<16x32xf32>
    %83 = tpu.matmul %81, %82, %cst_28 {dimension_numbers = #tpu.dot_dimension_numbers<[1], [0], [0], [1], [0, 0, 1, 1], [], []>} : vector<16x32xf32>, vector<32x32xf32>, vector<16x32xf32> -> vector<16x32xf32>
    %c0_29 = arith.constant 0 : index
    %c0_30 = arith.constant 0 : index
    %84 = vector.load %arg6[%c0_29, %c0_30] : memref<1x32xf32, #tpu.memory_space<vmem>>, vector<1x32xf32>
    %85 = vector.broadcast %84 : vector<1x32xf32> to vector<16x32xf32>
    %86 = arith.addf %83, %85 : vector<16x32xf32>
    %87 = arith.addf %0, %86 : vector<16x32xf32>
    %cst_31 = arith.constant dense<0.000000e+00> : vector<16xf32>
    %88 = vector.multi_reduction <add>, %87, %cst_31 [1] : vector<16x32xf32> to vector<16xf32>
    %89 = vector.shape_cast %88 : vector<16xf32> to vector<16x1xf32>
    %cst_32 = arith.constant 3.200000e+01 : f32
    %90 = vector.broadcast %cst_32 : f32 to vector<16x1xf32>
    %91 = arith.divf %89, %90 : vector<16x1xf32>
    %92 = vector.broadcast %91 : vector<16x1xf32> to vector<16x32xf32>
    %93 = arith.subf %87, %92 : vector<16x32xf32>
    %94 = arith.mulf %93, %93 : vector<16x32xf32>
    %cst_33 = arith.constant dense<0.000000e+00> : vector<16xf32>
    %95 = vector.multi_reduction <add>, %94, %cst_33 [1] : vector<16x32xf32> to vector<16xf32>
    %96 = vector.shape_cast %95 : vector<16xf32> to vector<16x1xf32>
    %cst_34 = arith.constant 3.200000e+01 : f32
    %97 = vector.broadcast %cst_34 : f32 to vector<16x1xf32>
    %98 = arith.divf %96, %97 : vector<16x1xf32>
    %99 = vector.broadcast %91 : vector<16x1xf32> to vector<16x32xf32>
    %100 = arith.subf %87, %99 : vector<16x32xf32>
    %cst_35 = arith.constant 9.99999974E-6 : f32
    %101 = vector.broadcast %cst_35 : f32 to vector<16x1xf32>
    %102 = arith.addf %98, %101 : vector<16x1xf32>
    %103 = math.rsqrt %102 : vector<16x1xf32>
    %104 = vector.broadcast %103 : vector<16x1xf32> to vector<16x32xf32>
    %105 = arith.mulf %100, %104 : vector<16x32xf32>
    %c0_36 = arith.constant 0 : index
    %c0_37 = arith.constant 0 : index
    %106 = vector.load %arg7[%c0_36, %c0_37] : memref<1x32xf32, #tpu.memory_space<vmem>>, vector<1x32xf32>
    %107 = vector.broadcast %106 : vector<1x32xf32> to vector<16x32xf32>
    %108 = arith.mulf %105, %107 : vector<16x32xf32>
    %c0_38 = arith.constant 0 : index
    %c0_39 = arith.constant 0 : index
    %109 = vector.load %arg8[%c0_38, %c0_39] : memref<1x32xf32, #tpu.memory_space<vmem>>, vector<1x32xf32>
    %110 = vector.broadcast %109 : vector<1x32xf32> to vector<16x32xf32>
    %111 = arith.addf %108, %110 : vector<16x32xf32>
    %c0_40 = arith.constant 0 : index
    %c0_41 = arith.constant 0 : index
    %112 = vector.load %arg2[%c0_40, %c0_41] : memref<16x2xf32, #tpu.memory_space<vmem>>, vector<16x1xf32>
    %c0_42 = arith.constant 0 : index
    %c1 = arith.constant 1 : index
    %113 = vector.load %arg2[%c0_42, %c1] : memref<16x2xf32, #tpu.memory_space<vmem>>, vector<16x1xf32>
    %c0_43 = arith.constant 0 : index
    %c0_44 = arith.constant 0 : index
    %114 = vector.load %arg10[%c0_43, %c0_44] : memref<1x64xf32, #tpu.memory_space<vmem>>, vector<1x64xf32>
    %c1_i32 = arith.constant 1 : i32
    %115 = tpu.dynamic_rotate %111 by %c1_i32 dim 0 : vector<16x32xf32>, i32 -> vector<16x32xf32>
    %116 = vector.broadcast %112 : vector<16x1xf32> to vector<16x32xf32>
    %117 = arith.mulf %115, %116 : vector<16x32xf32>
    %c15_i32 = arith.constant 15 : i32
    %118 = tpu.dynamic_rotate %111 by %c15_i32 dim 0 : vector<16x32xf32>, i32 -> vector<16x32xf32>
    %119 = vector.broadcast %113 : vector<16x1xf32> to vector<16x32xf32>
    %120 = arith.mulf %118, %119 : vector<16x32xf32>
    %121 = tpu.concatenate %117, %111, %120 in 1 : vector<16x32xf32>, vector<16x32xf32>, vector<16x32xf32> -> vector<16x96xf32>
    %c0_45 = arith.constant 0 : index
    %c0_46 = arith.constant 0 : index
    %122 = vector.load %arg9[%c0_45, %c0_46] : memref<96x64xf32, #tpu.memory_space<vmem>>, vector<96x64xf32>
    %cst_47 = arith.constant dense<0.000000e+00> : vector<16x64xf32>
    %123 = tpu.matmul %121, %122, %cst_47 {dimension_numbers = #tpu.dot_dimension_numbers<[1], [0], [0], [1], [0, 0, 1, 1], [], []>} : vector<16x96xf32>, vector<96x64xf32>, vector<16x64xf32> -> vector<16x64xf32>
    %124 = vector.broadcast %114 : vector<1x64xf32> to vector<16x64xf32>
    %125 = arith.addf %123, %124 : vector<16x64xf32>
    %cst_48 = arith.constant 0.000000e+00 : f32
    %126 = vector.broadcast %cst_48 : f32 to vector<16x64xf32>
    %127 = arith.maximumf %125, %126 : vector<16x64xf32>
    %c0_49 = arith.constant 0 : index
    %c0_50 = arith.constant 0 : index
    %128 = vector.load %arg12[%c0_49, %c0_50] : memref<1x32xf32, #tpu.memory_space<vmem>>, vector<1x32xf32>
    %c1_i32_51 = arith.constant 1 : i32
    %129 = tpu.dynamic_rotate %127 by %c1_i32_51 dim 0 : vector<16x64xf32>, i32 -> vector<16x64xf32>
    %130 = vector.broadcast %112 : vector<16x1xf32> to vector<16x64xf32>
    %131 = arith.mulf %129, %130 : vector<16x64xf32>
    %c15_i32_52 = arith.constant 15 : i32
    %132 = tpu.dynamic_rotate %127 by %c15_i32_52 dim 0 : vector<16x64xf32>, i32 -> vector<16x64xf32>
    %133 = vector.broadcast %113 : vector<16x1xf32> to vector<16x64xf32>
    %134 = arith.mulf %132, %133 : vector<16x64xf32>
    %135 = tpu.concatenate %131, %127, %134 in 1 : vector<16x64xf32>, vector<16x64xf32>, vector<16x64xf32> -> vector<16x192xf32>
    %c0_53 = arith.constant 0 : index
    %c0_54 = arith.constant 0 : index
    %136 = vector.load %arg11[%c0_53, %c0_54] : memref<192x32xf32, #tpu.memory_space<vmem>>, vector<192x32xf32>
    %cst_55 = arith.constant dense<0.000000e+00> : vector<16x32xf32>
    %137 = tpu.matmul %135, %136, %cst_55 {dimension_numbers = #tpu.dot_dimension_numbers<[1], [0], [0], [1], [0, 0, 1, 1], [], []>} : vector<16x192xf32>, vector<192x32xf32>, vector<16x32xf32> -> vector<16x32xf32>
    %138 = vector.broadcast %128 : vector<1x32xf32> to vector<16x32xf32>
    %139 = arith.addf %137, %138 : vector<16x32xf32>
    %140 = arith.addf %111, %139 : vector<16x32xf32>
    %cst_56 = arith.constant dense<0.000000e+00> : vector<16xf32>
    %141 = vector.multi_reduction <add>, %140, %cst_56 [1] : vector<16x32xf32> to vector<16xf32>
    %142 = vector.shape_cast %141 : vector<16xf32> to vector<16x1xf32>
    %cst_57 = arith.constant 3.200000e+01 : f32
    %143 = vector.broadcast %cst_57 : f32 to vector<16x1xf32>
    %144 = arith.divf %142, %143 : vector<16x1xf32>
    %145 = vector.broadcast %144 : vector<16x1xf32> to vector<16x32xf32>
    %146 = arith.subf %140, %145 : vector<16x32xf32>
    %147 = arith.mulf %146, %146 : vector<16x32xf32>
    %cst_58 = arith.constant dense<0.000000e+00> : vector<16xf32>
    %148 = vector.multi_reduction <add>, %147, %cst_58 [1] : vector<16x32xf32> to vector<16xf32>
    %149 = vector.shape_cast %148 : vector<16xf32> to vector<16x1xf32>
    %cst_59 = arith.constant 3.200000e+01 : f32
    %150 = vector.broadcast %cst_59 : f32 to vector<16x1xf32>
    %151 = arith.divf %149, %150 : vector<16x1xf32>
    %152 = vector.broadcast %144 : vector<16x1xf32> to vector<16x32xf32>
    %153 = arith.subf %140, %152 : vector<16x32xf32>
    %cst_60 = arith.constant 9.99999974E-6 : f32
    %154 = vector.broadcast %cst_60 : f32 to vector<16x1xf32>
    %155 = arith.addf %151, %154 : vector<16x1xf32>
    %156 = math.rsqrt %155 : vector<16x1xf32>
    %157 = vector.broadcast %156 : vector<16x1xf32> to vector<16x32xf32>
    %158 = arith.mulf %153, %157 : vector<16x32xf32>
    %159 = vector.extract_strided_slice %1 {offsets = [0, 0], sizes = [16, 32], strides = [1, 1]} : vector<16x64xf32> to vector<16x32xf32>
    %160 = vector.extract_strided_slice %1 {offsets = [0, 32], sizes = [16, 32], strides = [1, 1]} : vector<16x64xf32> to vector<16x32xf32>
    %cst_61 = arith.constant 1.000000e+00 : f32
    %161 = vector.broadcast %cst_61 : f32 to vector<16x32xf32>
    %162 = arith.addf %161, %159 : vector<16x32xf32>
    %163 = arith.mulf %158, %162 : vector<16x32xf32>
    %164 = arith.addf %163, %160 : vector<16x32xf32>
    %c0_62 = arith.constant 0 : index
    %c0_63 = arith.constant 0 : index
    %165 = vector.load %arg13[%c0_62, %c0_63] : memref<16x32xf32, #tpu.memory_space<vmem>>, vector<16x32xf32>
    tpu.vector_store %arg13[%c0_62, %c0_63], %164 {strides = array<i32>} : memref<16x32xf32, #tpu.memory_space<vmem>>, vector<16x32xf32>,
    return
  }
}

</mosaic_0001>

<llo_original>
// kernel: tpu_custom_call.1
$region0: #{tpu_custom_call.1}
  #allocation0 [shape = 'u32[]', space=smem, size = 0x4, offset = 0x4, fixed_abs, tag = 'smem constant byte address 0x4 - core index']
  #allocation1 [shape = 'u32[144,128]{1,0:T(1,128)}', space=vmem, size = 0x12000, scoped, tag = 'internal scratch']
  %s0 = inlined_call_operand.vmem [shape: f32[16,32], index: 0, kind: input, shape index: {}]
  %s1 = inlined_call_operand.vmem [shape: f32[16,64], index: 1, kind: input, shape index: {}]
  %s2 = inlined_call_operand.vmem [shape: f32[16,2], index: 2, kind: input, shape index: {}]
  %s3 = inlined_call_operand.vmem [shape: f32[32,96], index: 3, kind: input, shape index: {}]
  %s4 = inlined_call_operand.vmem [shape: f32[1,96], index: 4, kind: input, shape index: {}]
  %s5 = inlined_call_operand.vmem [shape: f32[32,32], index: 5, kind: input, shape index: {}]
  %s6 = inlined_call_operand.vmem [shape: f32[1,32], index: 6, kind: input, shape index: {}]
  %s7 = inlined_call_operand.vmem [shape: f32[1,32], index: 7, kind: input, shape index: {}]
  %s8 = inlined_call_operand.vmem [shape: f32[1,32], index: 8, kind: input, shape index: {}]
  %s9 = inlined_call_operand.vmem [shape: f32[96,64], index: 9, kind: input, shape index: {}]
  %s10 = inlined_call_operand.vmem [shape: f32[1,64], index: 10, kind: input, shape index: {}]
  %s11 = inlined_call_operand.vmem [shape: f32[192,32], index: 11, kind: input, shape index: {}]
  %s12 = inlined_call_operand.vmem [shape: f32[1,32], index: 12, kind: input, shape index: {}]
  %s13 = inlined_call_operand.hbm [shape: f32[16,32], index: 13, kind: output, shape index: {}]
  %s14 = sld [smem:[#allocation0]]
  $region62: #{tpu_custom_call.1} parent=0
    _
  %s16 = ssub.s32 1, %s14
  %s17 = scalar_select 0, %s16, %s14
  $region1: #{tpu_custom_call.1} parent=0
    #allocation2 [shape = 'u8[8192]{0}', space=vmem, size = 0x2000, scoped, tag = 'output window, operand 0, single buffered']
    #allocation3 [shape = 's32[1]{0}', space=sflag, size = 0x4, scoped, tag = 'scoped memory for tpu_custom_call.1']
    %18 = vsyncpa [#allocation3], 0
    // Predicated region
    $region2: #{tpu_custom_call.1} parent=1 // pred_check
      _
    $region3: #{tpu_custom_call.1} parent=1 // pred_check_branch
      %20 = sbr.rel (0) target = $region5
    $region4: #{tpu_custom_call.1} parent=1 // pred_region
      _
    $region5: #{tpu_custom_call.1} parent=1 // pred_fallthru
      _
    // Predicated region
    $region6: #{tpu_custom_call.1} parent=1 // pred_check
      _
    $region7: #{tpu_custom_call.1} parent=1 // pred_check_branch
      %22 = sbr.rel (0) target = $region9
    $region8: #{tpu_custom_call.1} parent=1 // pred_region
      _
    $region9: #{tpu_custom_call.1} parent=1 // pred_fallthru
      _
    // Predicated region
    $region10: #{tpu_custom_call.1} parent=1 // pred_check
      _
    $region11: #{tpu_custom_call.1} parent=1 // pred_check_branch
      %24 = sbr.rel (0) target = $region13
    $region12: #{tpu_custom_call.1} parent=1 // pred_region
      _
    $region13: #{tpu_custom_call.1} parent=1 // pred_fallthru
      _
    // Predicated region
    $region14: #{tpu_custom_call.1} parent=1 // pred_check
      _
    $region15: #{tpu_custom_call.1} parent=1 // pred_check_branch
      %26 = sbr.rel (0) target = $region17
    $region16: #{tpu_custom_call.1} parent=1 // pred_region
      _
    $region17: #{tpu_custom_call.1} parent=1 // pred_fallthru
      _
    // Predicated region
    $region18: #{tpu_custom_call.1} parent=1 // pred_check
      _
    $region19: #{tpu_custom_call.1} parent=1 // pred_check_branch
      %28 = sbr.rel (0) target = $region21
    $region20: #{tpu_custom_call.1} parent=1 // pred_region
      _
    $region21: #{tpu_custom_call.1} parent=1 // pred_fallthru
      _
    // Predicated region
    $region22: #{tpu_custom_call.1} parent=1 // pred_check
      _
    $region23: #{tpu_custom_call.1} parent=1 // pred_check_branch
      %30 = sbr.rel (0) target = $region25
    $region24: #{tpu_custom_call.1} parent=1 // pred_region
      _
    $region25: #{tpu_custom_call.1} parent=1 // pred_fallthru
      _
    // Predicated region
    $region26: #{tpu_custom_call.1} parent=1 // pred_check
      _
    $region27: #{tpu_custom_call.1} parent=1 // pred_check_branch
      %32 = sbr.rel (0) target = $region29
    $region28: #{tpu_custom_call.1} parent=1 // pred_region
      _
    $region29: #{tpu_custom_call.1} parent=1 // pred_fallthru
      _
    // Predicated region
    $region30: #{tpu_custom_call.1} parent=1 // pred_check
      _
    $region31: #{tpu_custom_call.1} parent=1 // pred_check_branch
      %34 = sbr.rel (0) target = $region33
    $region32: #{tpu_custom_call.1} parent=1 // pred_region
      _
    $region33: #{tpu_custom_call.1} parent=1 // pred_fallthru
      _
    // Predicated region
    $region34: #{tpu_custom_call.1} parent=1 // pred_check
      _
    $region35: #{tpu_custom_call.1} parent=1 // pred_check_branch
      %36 = sbr.rel (0) target = $region37
    $region36: #{tpu_custom_call.1} parent=1 // pred_region
      _
    $region37: #{tpu_custom_call.1} parent=1 // pred_fallthru
      _
    // Predicated region
    $region38: #{tpu_custom_call.1} parent=1 // pred_check
      _
    $region39: #{tpu_custom_call.1} parent=1 // pred_check_branch
      %38 = sbr.rel (0) target = $region41
    $region40: #{tpu_custom_call.1} parent=1 // pred_region
      _
    $region41: #{tpu_custom_call.1} parent=1 // pred_fallthru
      _
    // Predicated region
    $region42: #{tpu_custom_call.1} parent=1 // pred_check
      _
    $region43: #{tpu_custom_call.1} parent=1 // pred_check_branch
      %40 = sbr.rel (0) target = $region45
    $region44: #{tpu_custom_call.1} parent=1 // pred_region
      _
    $region45: #{tpu_custom_call.1} parent=1 // pred_fallthru
      _
    // Predicated region
    $region46: #{tpu_custom_call.1} parent=1 // pred_check
      _
    $region47: #{tpu_custom_call.1} parent=1 // pred_check_branch
      %42 = sbr.rel (0) target = $region49
    $region48: #{tpu_custom_call.1} parent=1 // pred_region
      _
    $region49: #{tpu_custom_call.1} parent=1 // pred_fallthru
      _
    // Predicated region
    $region50: #{tpu_custom_call.1} parent=1 // pred_check
      _
    $region51: #{tpu_custom_call.1} parent=1 // pred_check_branch
      %44 = sbr.rel (0) target = $region53
    $region52: #{tpu_custom_call.1} parent=1 // pred_region
      _
    $region53: #{tpu_custom_call.1} parent=1 // pred_fallthru
      _
    %v45 = vld [vmem:[%s0] sm:$0xff]
    %v46 = vld [vmem:[%s0 + $0x8] sm:$0xff]
    %v47 = vld [vmem:[%s1] sm:$0xff]
    %v48 = vld [vmem:[%s1 + $0x8] sm:$0xff]
    %v49 = vld [vmem:[%s3] sm:$0xff]
    %v50 = vld [vmem:[%s3 + $0x8] sm:$0xff]
    %v51 = vld [vmem:[%s3 + $0x10] sm:$0xff]
    %v52 = vld [vmem:[%s3 + $0x18] sm:$0xff]
    %v53 = vld [vmem:[%s4] sm:$0x1]
    %v55 = vlaneseq
    %v56 = vshrl.u32 %v55, 7
    %v57 = vsub.s32 0, %v56
    %v58 = vrot.slane %v53, %v57
    %vm60 = vcmask 261120
    %v62 = vsel %vm60, %v45, 0
    %v65 = vsel %vm60, %v46, 0
    %67 = vmatprep.subr.mxu0 0.0
    %68 = vmatpush1.msra.mxu0 0.0
    %69 = vmatprep.subr.mxu0 0.0
    %70 = vmatpush1.msra.mxu0 0.0
    %71 = vmatprep.subr.mxu0 0.0
    %72 = vmatpush1.msra.mxu0 0.0
    %73 = vmatprep.subr.mxu0 0.0
    %74 = vmatpush1.msra.mxu0 0.0
    %75 = vmatprep.subr.mxu0 0.0
    %76 = vmatpush1.msra.mxu0 0.0
    %77 = vmatprep.subr.mxu0 0.0
    %78 = vmatpush1.msra.mxu0 0.0
    %79 = vmatprep.subr.mxu0 0.0
    %80 = vmatpush1.msra.mxu0 0.0
    %81 = vmatprep.subr.mxu0 0.0
    %82 = vmatpush1.msra.mxu0 0.0
    %83 = vmatprep.subr.mxu0 0.0
    %84 = vmatpush1.msra.mxu0 0.0
    %85 = vmatprep.subr.mxu0 0.0
    %86 = vmatpush1.msra.mxu0 0.0
    %87 = vmatprep.subr.mxu0 0.0
    %88 = vmatpush1.msra.mxu0 0.0
    %89 = vmatprep.subr.mxu0 0.0
    %90 = vmatpush1.msra.mxu0 0.0
    %91 = vmatprep.subr.mxu0 0.0
    %92 = vmatpush1.msra.mxu0 %v52
    %93 = vmatprep.subr.mxu0 0.0
    %94 = vmatpush1.msra.mxu0 %v51
    %95 = vmatprep.subr.mxu0 0.0
    %96 = vmatpush1.msra.mxu0 %v50
    %97 = vmatprep.subr.mxu0 0.0
    %98 = vmatpush1.msra.mxu0 %v49
    %99 = vmatprep.subr.mxu0 0.0
    %100 = vmatpush2.msra.mxu0 0.0
    %101 = vmatprep.subr.mxu0 0.0
    %102 = vmatpush2.msra.mxu0 0.0
    %103 = vmatprep.subr.mxu0 0.0
    %104 = vmatpush2.msra.mxu0 0.0
    %105 = vmatprep.subr.mxu0 0.0
    %106 = vmatpush2.msra.mxu0 0.0
    %107 = vmatprep.subr.mxu0 0.0
    %108 = vmatpush2.msra.mxu0 0.0
    %109 = vmatprep.subr.mxu0 0.0
    %110 = vmatpush2.msra.mxu0 0.0
    %111 = vmatprep.subr.mxu0 0.0
    %112 = vmatpush2.msra.mxu0 0.0
    %113 = vmatprep.subr.mxu0 0.0
    %114 = vmatpush2.msra.mxu0 0.0
    %115 = vmatprep.subr.mxu0 0.0
    %116 = vmatpush2.msra.mxu0 0.0
    %117 = vmatprep.subr.mxu0 0.0
    %118 = vmatpush2.msra.mxu0 0.0
    %119 = vmatprep.subr.mxu0 0.0
    %120 = vmatpush2.msra.mxu0 0.0
    %121 = vmatprep.subr.mxu0 0.0
    %122 = vmatpush2.msra.mxu0 0.0
    %123 = vmatprep.subr.mxu0 0.0
    %124 = vmatpush2.msra.mxu0 0.0
    %125 = vmatprep.subr.mxu0 0.0
    %126 = vmatpush2.msra.mxu0 0.0
    %127 = vmatprep.subr.mxu0 0.0
    %128 = vmatpush2.msra.mxu0 0.0
    %129 = vmatprep.subr.mxu0 0.0
    %130 = vmatpush2.msra.mxu0 0.0
    %131 = vmatprep.mubr.f32.mxu0 0.0
    %132 = vmatmul.mubr.f32.gmra.mxu0 %v62
    %v133 = vpop.f32.mrf.mxu0
    %v134 = vadd.f32 %v58, %v133
    %v135 = vpop.f32.mrf.mxu0
    %136 = vmatprep.mubr.f32.mxu0 0.0
    %137 = vmatmul.mubr.f32.gmra.mxu0 %v65
    %v138 = vpop.f32.mrf.mxu0
    %v139 = vadd.f32 %v58, %v138
    %v140 = vpop.f32.mrf.mxu0
    %141 = vdwg.mxu0
    %143 = vrot.lane.b32.xlu0 %v134, 96
    %v144 = vpop.permute.xlu0 %143
    %vm145 = vcmask 64512
    %v146 = vsel %vm145, %v134, 0
    %v148 = vsel %vm145, %v144, 0
    %150 = vmatprep.subr.mxu0 0.0
    %151 = vmatpush1.xpose.msra.mxu0 0.0
    %152 = vmatprep.subr.mxu0 0.0
    %153 = vmatpush1.xpose.msra.mxu0 0.0
    %154 = vmatprep.subr.mxu0 0.0
    %155 = vmatpush1.xpose.msra.mxu0 0.0
    %156 = vmatprep.subr.mxu0 0.0
    %157 = vmatpush1.xpose.msra.mxu0 0.0
    %158 = vmatprep.subr.mxu0 0.0
    %159 = vmatpush1.xpose.msra.mxu0 0.0
    %160 = vmatprep.subr.mxu0 0.0
    %161 = vmatpush1.xpose.msra.mxu0 0.0
    %162 = vmatprep.subr.mxu0 0.0
    %163 = vmatpush1.xpose.msra.mxu0 0.0
    %164 = vmatprep.subr.mxu0 0.0
    %165 = vmatpush1.xpose.msra.mxu0 0.0
    %166 = vmatprep.subr.mxu0 0.0
    %167 = vmatpush1.xpose.msra.mxu0 0.0
    %168 = vmatprep.subr.mxu0 0.0
    %169 = vmatpush1.xpose.msra.mxu0 0.0
    %170 = vmatprep.subr.mxu0 0.0
    %171 = vmatpush1.xpose.msra.mxu0 0.0
    %172 = vmatprep.subr.mxu0 0.0
    %173 = vmatpush1.xpose.msra.mxu0 0.0
    %174 = vmatprep.subr.mxu0 0.0
    %175 = vmatpush1.xpose.msra.mxu0 0.0
    %176 = vmatprep.subr.mxu0 0.0
    %177 = vmatpush1.xpose.msra.mxu0 0.0
    %178 = vmatprep.subr.mxu0 0.0
    %179 = vmatpush1.xpose.msra.mxu0 0.0
    %180 = vmatprep.subr.mxu0 0.0
    %181 = vmatpush1.xpose.msra.mxu0 %v148
    %182 = vmatprep.subr.mxu0 0.0
    %183 = vmatpush2.xpose.msra.mxu0 0.0
    %184 = vmatprep.subr.mxu0 0.0
    %185 = vmatpush2.xpose.msra.mxu0 0.0
    %186 = vmatprep.subr.mxu0 0.0
    %187 = vmatpush2.xpose.msra.mxu0 0.0
    %188 = vmatprep.subr.mxu0 0.0
    %189 = vmatpush2.xpose.msra.mxu0 0.0
    %190 = vmatprep.subr.mxu0 0.0
    %191 = vmatpush2.xpose.msra.mxu0 0.0
    %192 = vmatprep.subr.mxu0 0.0
    %193 = vmatpush2.xpose.msra.mxu0 0.0
    %194 = vmatprep.subr.mxu0 0.0
    %195 = vmatpush2.xpose.msra.mxu0 0.0
    %196 = vmatprep.subr.mxu0 0.0
    %197 = vmatpush2.xpose.msra.mxu0 0.0
    %198 = vmatprep.subr.mxu0 0.0
    %199 = vmatpush2.xpose.msra.mxu0 0.0
    %200 = vmatprep.subr.mxu0 0.0
    %201 = vmatpush2.xpose.msra.mxu0 0.0
    %202 = vmatprep.subr.mxu0 0.0
    %203 = vmatpush2.xpose.msra.mxu0 0.0
    %204 = vmatprep.subr.mxu0 0.0
    %205 = vmatpush2.xpose.msra.mxu0 0.0
    %206 = vmatprep.subr.mxu0 0.0
    %207 = vmatpush2.xpose.msra.mxu0 0.0
    %208 = vmatprep.subr.mxu0 0.0
    %209 = vmatpush2.xpose.msra.mxu0 0.0
    %210 = vmatprep.subr.mxu0 0.0
    %211 = vmatpush2.xpose.msra.mxu0 0.0
    %212 = vmatprep.subr.mxu0 0.0
    %213 = vmatpush2.xpose.msra.mxu0 0.0
    %214 = vmatprep.mubr.f32.mxu0 0.0
    %215 = vmatmul.mubr.f32.gmra.mxu0 %v146
    %v216 = vpop.f32.mrf.mxu0
    %v217 = vadd.f32 0.0, %v216
    %v218 = vpop.f32.mrf.mxu0
    %219 = vdwg.mxu0
    %220 = vrot.lane.b32.xlu0 %v134, 120
    %v221 = vpop.permute.xlu0 %220
    %222 = vrot.lane.b32.xlu0 %v134, 88
    %v223 = vpop.permute.xlu0 %222
    %v224 = vsel %vm145, %v221, 0
    %v226 = vsel %vm145, %v223, 0
    %228 = vmatprep.subr.mxu0 0.0
    %229 = vmatpush1.xpose.msra.mxu0 0.0
    %230 = vmatprep.subr.mxu0 0.0
    %231 = vmatpush1.xpose.msra.mxu0 0.0
    %232 = vmatprep.subr.mxu0 0.0
    %233 = vmatpush1.xpose.msra.mxu0 0.0
    %234 = vmatprep.subr.mxu0 0.0
    %235 = vmatpush1.xpose.msra.mxu0 0.0
    %236 = vmatprep.subr.mxu0 0.0
    %237 = vmatpush1.xpose.msra.mxu0 0.0
    %238 = vmatprep.subr.mxu0 0.0
    %239 = vmatpush1.xpose.msra.mxu0 0.0
    %240 = vmatprep.subr.mxu0 0.0
    %241 = vmatpush1.xpose.msra.mxu0 0.0
    %242 = vmatprep.subr.mxu0 0.0
    %243 = vmatpush1.xpose.msra.mxu0 0.0
    %244 = vmatprep.subr.mxu0 0.0
    %245 = vmatpush1.xpose.msra.mxu0 0.0
    %246 = vmatprep.subr.mxu0 0.0
    %247 = vmatpush1.xpose.msra.mxu0 0.0
    %248 = vmatprep.subr.mxu0 0.0
    %249 = vmatpush1.xpose.msra.mxu0 0.0
    %250 = vmatprep.subr.mxu0 0.0
    %251 = vmatpush1.xpose.msra.mxu0 0.0
    %252 = vmatprep.subr.mxu0 0.0
    %253 = vmatpush1.xpose.msra.mxu0 0.0
    %254 = vmatprep.subr.mxu0 0.0
    %255 = vmatpush1.xpose.msra.mxu0 0.0
    %256 = vmatprep.subr.mxu0 0.0
    %257 = vmatpush1.xpose.msra.mxu0 0.0
    %258 = vmatprep.subr.mxu0 0.0
    %259 = vmatpush1.xpose.msra.mxu0 %v226
    %260 = vmatprep.subr.mxu0 0.0
    %261 = vmatpush2.xpose.msra.mxu0 0.0
    %262 = vmatprep.subr.mxu0 0.0
    %263 = vmatpush2.xpose.msra.mxu0 0.0
    %264 = vmatprep.subr.mxu0 0.0
    %265 = vmatpush2.xpose.msra.mxu0 0.0
    %266 = vmatprep.subr.mxu0 0.0
    %267 = vmatpush2.xpose.msra.mxu0 0.0
    %268 = vmatprep.subr.mxu0 0.0
    %269 = vmatpush2.xpose.msra.mxu0 0.0
    %270 = vmatprep.subr.mxu0 0.0
    %271 = vmatpush2.xpose.msra.mxu0 0.0
    %272 = vmatprep.subr.mxu0 0.0
    %273 = vmatpush2.xpose.msra.mxu0 0.0
    %274 = vmatprep.subr.mxu0 0.0
    %275 = vmatpush2.xpose.msra.mxu0 0.0
    %276 = vmatprep.subr.mxu0 0.0
    %277 = vmatpush2.xpose.msra.mxu0 0.0
    %278 = vmatprep.subr.mxu0 0.0
    %279 = vmatpush2.xpose.msra.mxu0 0.0
    %280 = vmatprep.subr.mxu0 0.0
    %281 = vmatpush2.xpose.msra.mxu0 0.0
    %282 = vmatprep.subr.mxu0 0.0
    %283 = vmatpush2.xpose.msra.mxu0 0.0
    %284 = vmatprep.subr.mxu0 0.0
    %285 = vmatpush2.xpose.msra.mxu0 0.0
    %286 = vmatprep.subr.mxu0 0.0
    %287 = vmatpush2.xpose.msra.mxu0 0.0
    %288 = vmatprep.subr.mxu0 0.0
    %289 = vmatpush2.xpose.msra.mxu0 0.0
    %290 = vmatprep.subr.mxu0 0.0
    %291 = vmatpush2.xpose.msra.mxu0 0.0
    %292 = vmatprep.mubr.f32.mxu0 0.0
    %293 = vmatmul.mubr.f32.gmra.mxu0 %v224
    %v294 = vpop.f32.mrf.mxu0
    %v295 = vadd.f32 0.0, %v294
    %v296 = vpop.f32.mrf.mxu0
    %297 = vdwg.mxu0
    %298 = vrot.lane.b32.xlu0 %v134, 112
    %v299 = vpop.permute.xlu0 %298
    %300 = vrot.lane.b32.xlu0 %v134, 80
    %v301 = vpop.permute.xlu0 %300
    %v302 = vsel %vm145, %v299, 0
    %v304 = vsel %vm145, %v301, 0
    %306 = vmatprep.subr.mxu0 0.0
    %307 = vmatpush1.xpose.msra.mxu0 0.0
    %308 = vmatprep.subr.mxu0 0.0
    %309 = vmatpush1.xpose.msra.mxu0 0.0
    %310 = vmatprep.subr.mxu0 0.0
    %311 = vmatpush1.xpose.msra.mxu0 0.0
    %312 = vmatprep.subr.mxu0 0.0
    %313 = vmatpush1.xpose.msra.mxu0 0.0
    %314 = vmatprep.subr.mxu0 0.0
    %315 = vmatpush1.xpose.msra.mxu0 0.0
    %316 = vmatprep.subr.mxu0 0.0
    %317 = vmatpush1.xpose.msra.mxu0 0.0
    %318 = vmatprep.subr.mxu0 0.0
    %319 = vmatpush1.xpose.msra.mxu0 0.0
    %320 = vmatprep.subr.mxu0 0.0
    %321 = vmatpush1.xpose.msra.mxu0 0.0
    %322 = vmatprep.subr.mxu0 0.0
    %323 = vmatpush1.xpose.msra.mxu0 0.0
    %324 = vmatprep.subr.mxu0 0.0
    %325 = vmatpush1.xpose.msra.mxu0 0.0
    %326 = vmatprep.subr.mxu0 0.0
    %327 = vmatpush1.xpose.msra.mxu0 0.0
    %328 = vmatprep.subr.mxu0 0.0
    %329 = vmatpush1.xpose.msra.mxu0 0.0
    %330 = vmatprep.subr.mxu0 0.0
    %331 = vmatpush1.xpose.msra.mxu0 0.0
    %332 = vmatprep.subr.mxu0 0.0
    %333 = vmatpush1.xpose.msra.mxu0 0.0
    %334 = vmatprep.subr.mxu0 0.0
    %335 = vmatpush1.xpose.msra.mxu0 0.0
    %336 = vmatprep.subr.mxu0 0.0
    %337 = vmatpush1.xpose.msra.mxu0 %v304
    %338 = vmatprep.subr.mxu0 0.0
    %339 = vmatpush2.xpose.msra.mxu0 0.0
    %340 = vmatprep.subr.mxu0 0.0
    %341 = vmatpush2.xpose.msra.mxu0 0.0
    %342 = vmatprep.subr.mxu0 0.0
    %343 = vmatpush2.xpose.msra.mxu0 0.0
    %344 = vmatprep.subr.mxu0 0.0
    %345 = vmatpush2.xpose.msra.mxu0 0.0
    %346 = vmatprep.subr.mxu0 0.0
    %347 = vmatpush2.xpose.msra.mxu0 0.0
    %348 = vmatprep.subr.mxu0 0.0
    %349 = vmatpush2.xpose.msra.mxu0 0.0
    %350 = vmatprep.subr.mxu0 0.0
    %351 = vmatpush2.xpose.msra.mxu0 0.0
    %352 = vmatprep.subr.mxu0 0.0
    %353 = vmatpush2.xpose.msra.mxu0 0.0
    %354 = vmatprep.subr.mxu0 0.0
    %355 = vmatpush2.xpose.msra.mxu0 0.0
    %356 = vmatprep.subr.mxu0 0.0
    %357 = vmatpush2.xpose.msra.mxu0 0.0
    %358 = vmatprep.subr.mxu0 0.0
    %359 = vmatpush2.xpose.msra.mxu0 0.0
    %360 = vmatprep.subr.mxu0 0.0
    %361 = vmatpush2.xpose.msra.mxu0 0.0
    %362 = vmatprep.subr.mxu0 0.0
    %363 = vmatpush2.xpose.msra.mxu0 0.0
    %364 = vmatprep.subr.mxu0 0.0
    %365 = vmatpush2.xpose.msra.mxu0 0.0
    %366 = vmatprep.subr.mxu0 0.0
    %367 = vmatpush2.xpose.msra.mxu0 0.0
    %368 = vmatprep.subr.mxu0 0.0
    %369 = vmatpush2.xpose.msra.mxu0 0.0
    %370 = vmatprep.mubr.f32.mxu0 0.0
    %371 = vmatmul.mubr.f32.gmra.mxu0 %v302
    %v372 = vpop.f32.mrf.mxu0
    %v373 = vadd.f32 0.0, %v372
    %v374 = vpop.f32.mrf.mxu0
    %375 = vdwg.mxu0
    %376 = vrot.lane.b32.xlu0 %v134, 104
    %v377 = vpop.permute.xlu0 %376
    %378 = vrot.lane.b32.xlu0 %v134, 72
    %v379 = vpop.permute.xlu0 %378
    %v380 = vsel %vm145, %v377, 0
    %v382 = vsel %vm145, %v379, 0
    %384 = vmatprep.subr.mxu0 0.0
    %385 = vmatpush1.xpose.msra.mxu0 0.0
    %386 = vmatprep.subr.mxu0 0.0
    %387 = vmatpush1.xpose.msra.mxu0 0.0
    %388 = vmatprep.subr.mxu0 0.0
    %389 = vmatpush1.xpose.msra.mxu0 0.0
    %390 = vmatprep.subr.mxu0 0.0
    %391 = vmatpush1.xpose.msra.mxu0 0.0
    %392 = vmatprep.subr.mxu0 0.0
    %393 = vmatpush1.xpose.msra.mxu0 0.0
    %394 = vmatprep.subr.mxu0 0.0
    %395 = vmatpush1.xpose.msra.mxu0 0.0
    %396 = vmatprep.subr.mxu0 0.0
    %397 = vmatpush1.xpose.msra.mxu0 0.0
    %398 = vmatprep.subr.mxu0 0.0
    %399 = vmatpush1.xpose.msra.mxu0 0.0
    %400 = vmatprep.subr.mxu0 0.0
    %401 = vmatpush1.xpose.msra.mxu0 0.0
    %402 = vmatprep.subr.mxu0 0.0
    %403 = vmatpush1.xpose.msra.mxu0 0.0
    %404 = vmatprep.subr.mxu0 0.0
    %405 = vmatpush1.xpose.msra.mxu0 0.0
    %406 = vmatprep.subr.mxu0 0.0
    %407 = vmatpush1.xpose.msra.mxu0 0.0
    %408 = vmatprep.subr.mxu0 0.0
    %409 = vmatpush1.xpose.msra.mxu0 0.0
    %410 = vmatprep.subr.mxu0 0.0
    %411 = vmatpush1.xpose.msra.mxu0 0.0
    %412 = vmatprep.subr.mxu0 0.0
    %413 = vmatpush1.xpose.msra.mxu0 0.0
    %414 = vmatprep.subr.mxu0 0.0
    %415 = vmatpush1.xpose.msra.mxu0 %v382
    %416 = vmatprep.subr.mxu0 0.0
    %417 = vmatpush2.xpose.msra.mxu0 0.0
    %418 = vmatprep.subr.mxu0 0.0
    %419 = vmatpush2.xpose.msra.mxu0 0.0
    %420 = vmatprep.subr.mxu0 0.0
    %421 = vmatpush2.xpose.msra.mxu0 0.0
    %422 = vmatprep.subr.mxu0 0.0
    %423 = vmatpush2.xpose.msra.mxu0 0.0
    %424 = vmatprep.subr.mxu0 0.0
    %425 = vmatpush2.xpose.msra.mxu0 0.0
    %426 = vmatprep.subr.mxu0 0.0
    %427 = vmatpush2.xpose.msra.mxu0 0.0
    %428 = vmatprep.subr.mxu0 0.0
    %429 = vmatpush2.xpose.msra.mxu0 0.0
    %430 = vmatprep.subr.mxu0 0.0
    %431 = vmatpush2.xpose.msra.mxu0 0.0
    %432 = vmatprep.subr.mxu0 0.0
    %433 = vmatpush2.xpose.msra.mxu0 0.0
    %434 = vmatprep.subr.mxu0 0.0
    %435 = vmatpush2.xpose.msra.mxu0 0.0
    %436 = vmatprep.subr.mxu0 0.0
    %437 = vmatpush2.xpose.msra.mxu0 0.0
    %438 = vmatprep.subr.mxu0 0.0
    %439 = vmatpush2.xpose.msra.mxu0 0.0
    %440 = vmatprep.subr.mxu0 0.0
    %441 = vmatpush2.xpose.msra.mxu0 0.0
    %442 = vmatprep.subr.mxu0 0.0
    %443 = vmatpush2.xpose.msra.mxu0 0.0
    %444 = vmatprep.subr.mxu0 0.0
    %445 = vmatpush2.xpose.msra.mxu0 0.0
    %446 = vmatprep.subr.mxu0 0.0
    %447 = vmatpush2.xpose.msra.mxu0 0.0
    %448 = vmatprep.mubr.f32.mxu0 0.0
    %449 = vmatmul.mubr.f32.gmra.mxu0 %v380
    %v450 = vpop.f32.mrf.mxu0
    %v451 = vadd.f32 0.0, %v450
    %v452 = vpop.f32.mrf.mxu0
    %453 = vdwg.mxu0
    %455 = vrot.lane.b32.xlu0 %v139, 96
    %v456 = vpop.permute.xlu0 %455
    %v457 = vsel %vm145, %v139, 0
    %v459 = vsel %vm145, %v456, 0
    %461 = vmatprep.subr.mxu0 0.0
    %462 = vmatpush1.xpose.msra.mxu0 0.0
    %463 = vmatprep.subr.mxu0 0.0
    %464 = vmatpush1.xpose.msra.mxu0 0.0
    %465 = vmatprep.subr.mxu0 0.0
    %466 = vmatpush1.xpose.msra.mxu0 0.0
    %467 = vmatprep.subr.mxu0 0.0
    %468 = vmatpush1.xpose.msra.mxu0 0.0
    %469 = vmatprep.subr.mxu0 0.0
    %470 = vmatpush1.xpose.msra.mxu0 0.0
    %471 = vmatprep.subr.mxu0 0.0
    %472 = vmatpush1.xpose.msra.mxu0 0.0
    %473 = vmatprep.subr.mxu0 0.0
    %474 = vmatpush1.xpose.msra.mxu0 0.0
    %475 = vmatprep.subr.mxu0 0.0
    %476 = vmatpush1.xpose.msra.mxu0 0.0
    %477 = vmatprep.subr.mxu0 0.0
    %478 = vmatpush1.xpose.msra.mxu0 0.0
    %479 = vmatprep.subr.mxu0 0.0
    %480 = vmatpush1.xpose.msra.mxu0 0.0
    %481 = vmatprep.subr.mxu0 0.0
    %482 = vmatpush1.xpose.msra.mxu0 0.0
    %483 = vmatprep.subr.mxu0 0.0
    %484 = vmatpush1.xpose.msra.mxu0 0.0
    %485 = vmatprep.subr.mxu0 0.0
    %486 = vmatpush1.xpose.msra.mxu0 0.0
    %487 = vmatprep.subr.mxu0 0.0
    %488 = vmatpush1.xpose.msra.mxu0 0.0
    %489 = vmatprep.subr.mxu0 0.0
    %490 = vmatpush1.xpose.msra.mxu0 0.0
    %491 = vmatprep.subr.mxu0 0.0
    %492 = vmatpush1.xpose.msra.mxu0 %v459
    %493 = vmatprep.subr.mxu0 0.0
    %494 = vmatpush2.xpose.msra.mxu0 0.0
    %495 = vmatprep.subr.mxu0 0.0
    %496 = vmatpush2.xpose.msra.mxu0 0.0
    %497 = vmatprep.subr.mxu0 0.0
    %498 = vmatpush2.xpose.msra.mxu0 0.0
    %499 = vmatprep.subr.mxu0 0.0
    %500 = vmatpush2.xpose.msra.mxu0 0.0
    %501 = vmatprep.subr.mxu0 0.0
    %502 = vmatpush2.xpose.msra.mxu0 0.0
    %503 = vmatprep.subr.mxu0 0.0
    %504 = vmatpush2.xpose.msra.mxu0 0.0
    %505 = vmatprep.subr.mxu0 0.0
    %506 = vmatpush2.xpose.msra.mxu0 0.0
    %507 = vmatprep.subr.mxu0 0.0
    %508 = vmatpush2.xpose.msra.mxu0 0.0
    %509 = vmatprep.subr.mxu0 0.0
    %510 = vmatpush2.xpose.msra.mxu0 0.0
    %511 = vmatprep.subr.mxu0 0.0
    %512 = vmatpush2.xpose.msra.mxu0 0.0
    %513 = vmatprep.subr.mxu0 0.0
    %514 = vmatpush2.xpose.msra.mxu0 0.0
    %515 = vmatprep.subr.mxu0 0.0
    %516 = vmatpush2.xpose.msra.mxu0 0.0
    %517 = vmatprep.subr.mxu0 0.0
    %518 = vmatpush2.xpose.msra.mxu0 0.0
    %519 = vmatprep.subr.mxu0 0.0
    %520 = vmatpush2.xpose.msra.mxu0 0.0
    %521 = vmatprep.subr.mxu0 0.0
    %522 = vmatpush2.xpose.msra.mxu0 0.0
    %523 = vmatprep.subr.mxu0 0.0
    %524 = vmatpush2.xpose.msra.mxu0 0.0
    %525 = vmatprep.mubr.f32.mxu0 0.0
    %526 = vmatmul.mubr.f32.gmra.mxu0 %v457
    %v527 = vpop.f32.mrf.mxu0
    %v528 = vadd.f32 0.0, %v527
    %v529 = vpop.f32.mrf.mxu0
    %530 = vdwg.mxu0
    %531 = vrot.lane.b32.xlu0 %v139, 120
    %v532 = vpop.permute.xlu0 %531
    %533 = vrot.lane.b32.xlu0 %v139, 88
    %v534 = vpop.permute.xlu0 %533
    %v535 = vsel %vm145, %v532, 0
    %v537 = vsel %vm145, %v534, 0
    %539 = vmatprep.subr.mxu0 0.0
    %540 = vmatpush1.xpose.msra.mxu0 0.0
    %541 = vmatprep.subr.mxu0 0.0
    %542 = vmatpush1.xpose.msra.mxu0 0.0
    %543 = vmatprep.subr.mxu0 0.0
    %544 = vmatpush1.xpose.msra.mxu0 0.0
    %545 = vmatprep.subr.mxu0 0.0
    %546 = vmatpush1.xpose.msra.mxu0 0.0
    %547 = vmatprep.subr.mxu0 0.0
    %548 = vmatpush1.xpose.msra.mxu0 0.0
    %549 = vmatprep.subr.mxu0 0.0
    %550 = vmatpush1.xpose.msra.mxu0 0.0
    %551 = vmatprep.subr.mxu0 0.0
    %552 = vmatpush1.xpose.msra.mxu0 0.0
    %553 = vmatprep.subr.mxu0 0.0
    %554 = vmatpush1.xpose.msra.mxu0 0.0
    %555 = vmatprep.subr.mxu0 0.0
    %556 = vmatpush1.xpose.msra.mxu0 0.0
    %557 = vmatprep.subr.mxu0 0.0
    %558 = vmatpush1.xpose.msra.mxu0 0.0
    %559 = vmatprep.subr.mxu0 0.0
    %560 = vmatpush1.xpose.msra.mxu0 0.0
    %561 = vmatprep.subr.mxu0 0.0
    %562 = vmatpush1.xpose.msra.mxu0 0.0
    %563 = vmatprep.subr.mxu0 0.0
    %564 = vmatpush1.xpose.msra.mxu0 0.0
    %565 = vmatprep.subr.mxu0 0.0
    %566 = vmatpush1.xpose.msra.mxu0 0.0
    %567 = vmatprep.subr.mxu0 0.0
    %568 = vmatpush1.xpose.msra.mxu0 0.0
    %569 = vmatprep.subr.mxu0 0.0
    %570 = vmatpush1.xpose.msra.mxu0 %v537
    %571 = vmatprep.subr.mxu0 0.0
    %572 = vmatpush2.xpose.msra.mxu0 0.0
    %573 = vmatprep.subr.mxu0 0.0
    %574 = vmatpush2.xpose.msra.mxu0 0.0
    %575 = vmatprep.subr.mxu0 0.0
    %576 = vmatpush2.xpose.msra.mxu0 0.0
    %577 = vmatprep.subr.mxu0 0.0
    %578 = vmatpush2.xpose.msra.mxu0 0.0
    %579 = vmatprep.subr.mxu0 0.0
    %580 = vmatpush2.xpose.msra.mxu0 0.0
    %581 = vmatprep.subr.mxu0 0.0
    %582 = vmatpush2.xpose.msra.mxu0 0.0
    %583 = vmatprep.subr.mxu0 0.0
    %584 = vmatpush2.xpose.msra.mxu0 0.0
    %585 = vmatprep.subr.mxu0 0.0
    %586 = vmatpush2.xpose.msra.mxu0 0.0
    %587 = vmatprep.subr.mxu0 0.0
    %588 = vmatpush2.xpose.msra.mxu0 0.0
    %589 = vmatprep.subr.mxu0 0.0
    %590 = vmatpush2.xpose.msra.mxu0 0.0
    %591 = vmatprep.subr.mxu0 0.0
    %592 = vmatpush2.xpose.msra.mxu0 0.0
    %593 = vmatprep.subr.mxu0 0.0
    %594 = vmatpush2.xpose.msra.mxu0 0.0
    %595 = vmatprep.subr.mxu0 0.0
    %596 = vmatpush2.xpose.msra.mxu0 0.0
    %597 = vmatprep.subr.mxu0 0.0
    %598 = vmatpush2.xpose.msra.mxu0 0.0
    %599 = vmatprep.subr.mxu0 0.0
    %600 = vmatpush2.xpose.msra.mxu0 0.0
    %601 = vmatprep.subr.mxu0 0.0
    %602 = vmatpush2.xpose.msra.mxu0 0.0
    %603 = vmatprep.mubr.f32.mxu0 0.0
    %604 = vmatmul.mubr.f32.gmra.mxu0 %v535
    %v605 = vpop.f32.mrf.mxu0
    %v606 = vadd.f32 0.0, %v605
    %v607 = vpop.f32.mrf.mxu0
    %608 = vdwg.mxu0
    %609 = vrot.lane.b32.xlu0 %v139, 112
    %v610 = vpop.permute.xlu0 %609
    %611 = vrot.lane.b32.xlu0 %v139, 80
    %v612 = vpop.permute.xlu0 %611
    %v613 = vsel %vm145, %v610, 0
    %v615 = vsel %vm145, %v612, 0
    %617 = vmatprep.subr.mxu0 0.0
    %618 = vmatpush1.xpose.msra.mxu0 0.0
    %619 = vmatprep.subr.mxu0 0.0
    %620 = vmatpush1.xpose.msra.mxu0 0.0
    %621 = vmatprep.subr.mxu0 0.0
    %622 = vmatpush1.xpose.msra.mxu0 0.0
    %623 = vmatprep.subr.mxu0 0.0
    %624 = vmatpush1.xpose.msra.mxu0 0.0
    %625 = vmatprep.subr.mxu0 0.0
    %626 = vmatpush1.xpose.msra.mxu0 0.0
    %627 = vmatprep.subr.mxu0 0.0
    %628 = vmatpush1.xpose.msra.mxu0 0.0
    %629 = vmatprep.subr.mxu0 0.0
    %630 = vmatpush1.xpose.msra.mxu0 0.0
    %631 = vmatprep.subr.mxu0 0.0
    %632 = vmatpush1.xpose.msra.mxu0 0.0
    %633 = vmatprep.subr.mxu0 0.0
    %634 = vmatpush1.xpose.msra.mxu0 0.0
    %635 = vmatprep.subr.mxu0 0.0
    %636 = vmatpush1.xpose.msra.mxu0 0.0
    %637 = vmatprep.subr.mxu0 0.0
    %638 = vmatpush1.xpose.msra.mxu0 0.0
    %639 = vmatprep.subr.mxu0 0.0
    %640 = vmatpush1.xpose.msra.mxu0 0.0
    %641 = vmatprep.subr.mxu0 0.0
    %642 = vmatpush1.xpose.msra.mxu0 0.0
    %643 = vmatprep.subr.mxu0 0.0
    %644 = vmatpush1.xpose.msra.mxu0 0.0
    %645 = vmatprep.subr.mxu0 0.0
    %646 = vmatpush1.xpose.msra.mxu0 0.0
    %647 = vmatprep.subr.mxu0 0.0
    %648 = vmatpush1.xpose.msra.mxu0 %v615
    %649 = vmatprep.subr.mxu0 0.0
    %650 = vmatpush2.xpose.msra.mxu0 0.0
    %651 = vmatprep.subr.mxu0 0.0
    %652 = vmatpush2.xpose.msra.mxu0 0.0
    %653 = vmatprep.subr.mxu0 0.0
    %654 = vmatpush2.xpose.msra.mxu0 0.0
    %655 = vmatprep.subr.mxu0 0.0
    %656 = vmatpush2.xpose.msra.mxu0 0.0
    %657 = vmatprep.subr.mxu0 0.0
    %658 = vmatpush2.xpose.msra.mxu0 0.0
    %659 = vmatprep.subr.mxu0 0.0
    %660 = vmatpush2.xpose.msra.mxu0 0.0
    %661 = vmatprep.subr.mxu0 0.0
    %662 = vmatpush2.xpose.msra.mxu0 0.0
    %663 = vmatprep.subr.mxu0 0.0
    %664 = vmatpush2.xpose.msra.mxu0 0.0
    %665 = vmatprep.subr.mxu0 0.0
    %666 = vmatpush2.xpose.msra.mxu0 0.0
    %667 = vmatprep.subr.mxu0 0.0
    %668 = vmatpush2.xpose.msra.mxu0 0.0
    %669 = vmatprep.subr.mxu0 0.0
    %670 = vmatpush2.xpose.msra.mxu0 0.0
    %671 = vmatprep.subr.mxu0 0.0
    %672 = vmatpush2.xpose.msra.mxu0 0.0
    %673 = vmatprep.subr.mxu0 0.0
    %674 = vmatpush2.xpose.msra.mxu0 0.0
    %675 = vmatprep.subr.mxu0 0.0
    %676 = vmatpush2.xpose.msra.mxu0 0.0
    %677 = vmatprep.subr.mxu0 0.0
    %678 = vmatpush2.xpose.msra.mxu0 0.0
    %679 = vmatprep.subr.mxu0 0.0
    %680 = vmatpush2.xpose.msra.mxu0 0.0
    %681 = vmatprep.mubr.f32.mxu0 0.0
    %682 = vmatmul.mubr.f32.gmra.mxu0 %v613
    %v683 = vpop.f32.mrf.mxu0
    %v684 = vadd.f32 0.0, %v683
    %v685 = vpop.f32.mrf.mxu0
    %686 = vdwg.mxu0
    %687 = vrot.lane.b32.xlu0 %v139, 104
    %v688 = vpop.permute.xlu0 %687
    %689 = vrot.lane.b32.xlu0 %v139, 72
    %v690 = vpop.permute.xlu0 %689
    %v691 = vsel %vm145, %v688, 0
    %v693 = vsel %vm145, %v690, 0
    %695 = vmatprep.subr.mxu0 0.0
    %696 = vmatpush1.xpose.msra.mxu0 0.0
    %697 = vmatprep.subr.mxu0 0.0
    %698 = vmatpush1.xpose.msra.mxu0 0.0
    %699 = vmatprep.subr.mxu0 0.0
    %700 = vmatpush1.xpose.msra.mxu0 0.0
    %701 = vmatprep.subr.mxu0 0.0
    %702 = vmatpush1.xpose.msra.mxu0 0.0
    %703 = vmatprep.subr.mxu0 0.0
    %704 = vmatpush1.xpose.msra.mxu0 0.0
    %705 = vmatprep.subr.mxu0 0.0
    %706 = vmatpush1.xpose.msra.mxu0 0.0
    %707 = vmatprep.subr.mxu0 0.0
    %708 = vmatpush1.xpose.msra.mxu0 0.0
    %709 = vmatprep.subr.mxu0 0.0
    %710 = vmatpush1.xpose.msra.mxu0 0.0
    %711 = vmatprep.subr.mxu0 0.0
    %712 = vmatpush1.xpose.msra.mxu0 0.0
    %713 = vmatprep.subr.mxu0 0.0
    %714 = vmatpush1.xpose.msra.mxu0 0.0
    %715 = vmatprep.subr.mxu0 0.0
    %716 = vmatpush1.xpose.msra.mxu0 0.0
    %717 = vmatprep.subr.mxu0 0.0
    %718 = vmatpush1.xpose.msra.mxu0 0.0
    %719 = vmatprep.subr.mxu0 0.0
    %720 = vmatpush1.xpose.msra.mxu0 0.0
    %721 = vmatprep.subr.mxu0 0.0
    %722 = vmatpush1.xpose.msra.mxu0 0.0
    %723 = vmatprep.subr.mxu0 0.0
    %724 = vmatpush1.xpose.msra.mxu0 0.0
    %725 = vmatprep.subr.mxu0 0.0
    %726 = vmatpush1.xpose.msra.mxu0 %v693
    %727 = vmatprep.subr.mxu0 0.0
    %728 = vmatpush2.xpose.msra.mxu0 0.0
    %729 = vmatprep.subr.mxu0 0.0
    %730 = vmatpush2.xpose.msra.mxu0 0.0
    %731 = vmatprep.subr.mxu0 0.0
    %732 = vmatpush2.xpose.msra.mxu0 0.0
    %733 = vmatprep.subr.mxu0 0.0
    %734 = vmatpush2.xpose.msra.mxu0 0.0
    %735 = vmatprep.subr.mxu0 0.0
    %736 = vmatpush2.xpose.msra.mxu0 0.0
    %737 = vmatprep.subr.mxu0 0.0
    %738 = vmatpush2.xpose.msra.mxu0 0.0
    %739 = vmatprep.subr.mxu0 0.0
    %740 = vmatpush2.xpose.msra.mxu0 0.0
    %741 = vmatprep.subr.mxu0 0.0
    %742 = vmatpush2.xpose.msra.mxu0 0.0
    %743 = vmatprep.subr.mxu0 0.0
    %744 = vmatpush2.xpose.msra.mxu0 0.0
    %745 = vmatprep.subr.mxu0 0.0
    %746 = vmatpush2.xpose.msra.mxu0 0.0
    %747 = vmatprep.subr.mxu0 0.0
    %748 = vmatpush2.xpose.msra.mxu0 0.0
    %749 = vmatprep.subr.mxu0 0.0
    %750 = vmatpush2.xpose.msra.mxu0 0.0
    %751 = vmatprep.subr.mxu0 0.0
    %752 = vmatpush2.xpose.msra.mxu0 0.0
    %753 = vmatprep.subr.mxu0 0.0
    %754 = vmatpush2.xpose.msra.mxu0 0.0
    %755 = vmatprep.subr.mxu0 0.0
    %756 = vmatpush2.xpose.msra.mxu0 0.0
    %757 = vmatprep.subr.mxu0 0.0
    %758 = vmatpush2.xpose.msra.mxu0 0.0
    %759 = vmatprep.mubr.f32.mxu0 0.0
    %760 = vmatmul.mubr.f32.gmra.mxu0 %v691
    %v761 = vpop.f32.mrf.mxu0
    %v762 = vadd.f32 0.0, %v761
    %v763 = vpop.f32.mrf.mxu0
    %764 = vdwg.mxu0
    %v765 = vmul.f32 %v217, 0.35355338
    %v766 = vmul.f32 %v295, 0.35355338
    %v767 = vmul.f32 %v373, 0.35355338
    %v768 = vmul.f32 %v451, 0.35355338
    %v769 = vmul.f32 %v528, 0.35355338
    %v770 = vmul.f32 %v606, 0.35355338
    %v771 = vmul.f32 %v684, 0.35355338
    %v772 = vmul.f32 %v762, 0.35355338
    %v773 = vsel %vm145, %v765, -inf
    %774 = vmax.xlane.f32.xlu0 %v773
    %v775 = vpop.xlane.xlu0 %774
    %v776 = vsel %vm145, %v766, -inf
    %777 = vmax.xlane.f32.xlu0 %v776
    %v778 = vpop.xlane.xlu0 %777
    %v779 = vsel %vm145, %v767, -inf
    %780 = vmax.xlane.f32.xlu0 %v779
    %v781 = vpop.xlane.xlu0 %780
    %v782 = vsel %vm145, %v768, -inf
    %783 = vmax.xlane.f32.xlu0 %v782
    %v784 = vpop.xlane.xlu0 %783
    %v785 = vsel %vm145, %v769, -inf
    %786 = vmax.xlane.f32.xlu0 %v785
    %v787 = vpop.xlane.xlu0 %786
    %v788 = vsel %vm145, %v770, -inf
    %789 = vmax.xlane.f32.xlu0 %v788
    %v790 = vpop.xlane.xlu0 %789
    %v791 = vsel %vm145, %v771, -inf
    %792 = vmax.xlane.f32.xlu0 %v791
    %v793 = vpop.xlane.xlu0 %792
    %v794 = vsel %vm145, %v772, -inf
    %795 = vmax.xlane.f32.xlu0 %v794
    %v796 = vpop.xlane.xlu0 %795
    %v797 = vsub.f32 %v765, %v775
    %v798 = vsub.f32 %v766, %v778
    %v799 = vsub.f32 %v767, %v781
    %v800 = vsub.f32 %v768, %v784
    %v801 = vsub.f32 %v769, %v787
    %v802 = vsub.f32 %v770, %v790
    %v803 = vsub.f32 %v771, %v793
    %v804 = vsub.f32 %v772, %v796
    %v805 = vmul.f32 %v797, 1.442695
    %v806 = vpow.pop %v805
    %v807 = vmul.f32 %v798, 1.442695
    %v808 = vpow.pop %v807
    %v809 = vmul.f32 %v799, 1.442695
    %v810 = vpow.pop %v809
    %v811 = vmul.f32 %v800, 1.442695
    %v812 = vpow.pop %v811
    %v813 = vmul.f32 %v801, 1.442695
    %v814 = vpow.pop %v813
    %v815 = vmul.f32 %v802, 1.442695
    %v816 = vpow.pop %v815
    %v817 = vmul.f32 %v803, 1.442695
    %v818 = vpow.pop %v817
    %v819 = vmul.f32 %v804, 1.442695
    %v820 = vpow.pop %v819
    %v821 = vsel %vm145, %v806, 0.0
    %822 = vadd.xlane.f32.xlu0 %v821
    %v823 = vpop.xlane.xlu0 %822
    %v824 = vsel %vm145, %v808, 0.0
    %825 = vadd.xlane.f32.xlu0 %v824
    %v826 = vpop.xlane.xlu0 %825
    %v827 = vsel %vm145, %v810, 0.0
    %828 = vadd.xlane.f32.xlu0 %v827
    %v829 = vpop.xlane.xlu0 %828
    %v830 = vsel %vm145, %v812, 0.0
    %831 = vadd.xlane.f32.xlu0 %v830
    %v832 = vpop.xlane.xlu0 %831
    %v833 = vsel %vm145, %v814, 0.0
    %834 = vadd.xlane.f32.xlu0 %v833
    %v835 = vpop.xlane.xlu0 %834
    %v836 = vsel %vm145, %v816, 0.0
    %837 = vadd.xlane.f32.xlu0 %v836
    %v838 = vpop.xlane.xlu0 %837
    %v839 = vsel %vm145, %v818, 0.0
    %840 = vadd.xlane.f32.xlu0 %v839
    %v841 = vpop.xlane.xlu0 %840
    %v842 = vsel %vm145, %v820, 0.0
    %843 = vadd.xlane.f32.xlu0 %v842
    %v844 = vpop.xlane.xlu0 %843
    %v845 = vrcp.pop %v823
    %v846 = vrcp.pop %v826
    %v847 = vrcp.pop %v829
    %v848 = vrcp.pop %v832
    %v849 = vrcp.pop %v835
    %v850 = vrcp.pop %v838
    %v851 = vrcp.pop %v841
    %v852 = vrcp.pop %v844
    %v853 = vmul.f32 %v806, %v845
    %v854 = vmul.f32 %v808, %v846
    %v855 = vmul.f32 %v810, %v847
    %v856 = vmul.f32 %v812, %v848
    %v857 = vmul.f32 %v814, %v849
    %v858 = vmul.f32 %v816, %v850
    %v859 = vmul.f32 %v818, %v851
    %v860 = vmul.f32 %v820, %v852
    %861 = vrot.lane.b32.xlu0 %v134, 64
    %v862 = vpop.permute.xlu0 %861
    %v865 = vsel %vm145, %v853, 0
    %867 = vmatprep.subr.mxu0 0.0
    %868 = vmatpush1.msra.mxu0 0.0
    %869 = vmatprep.subr.mxu0 0.0
    %870 = vmatpush1.msra.mxu0 0.0
    %871 = vmatprep.subr.mxu0 0.0
    %872 = vmatpush1.msra.mxu0 0.0
    %873 = vmatprep.subr.mxu0 0.0
    %874 = vmatpush1.msra.mxu0 0.0
    %875 = vmatprep.subr.mxu0 0.0
    %876 = vmatpush1.msra.mxu0 0.0
    %877 = vmatprep.subr.mxu0 0.0
    %878 = vmatpush1.msra.mxu0 0.0
    %879 = vmatprep.subr.mxu0 0.0
    %880 = vmatpush1.msra.mxu0 0.0
    %881 = vmatprep.subr.mxu0 0.0
    %882 = vmatpush1.msra.mxu0 0.0
    %883 = vmatprep.subr.mxu0 0.0
    %884 = vmatpush1.msra.mxu0 0.0
    %885 = vmatprep.subr.mxu0 0.0
    %886 = vmatpush1.msra.mxu0 0.0
    %887 = vmatprep.subr.mxu0 0.0
    %888 = vmatpush1.msra.mxu0 0.0
    %889 = vmatprep.subr.mxu0 0.0
    %890 = vmatpush1.msra.mxu0 0.0
    %891 = vmatprep.subr.mxu0 0.0
    %892 = vmatpush1.msra.mxu0 0.0
    %893 = vmatprep.subr.mxu0 0.0
    %894 = vmatpush1.msra.mxu0 0.0
    %895 = vmatprep.subr.mxu0 0.0
    %896 = vmatpush1.msra.mxu0 0.0
    %897 = vmatprep.subr.mxu0 0.0
    %898 = vmatpush1.msra.mxu0 %v862
    %899 = vmatprep.subr.mxu0 0.0
    %900 = vmatpush2.msra.mxu0 0.0
    %901 = vmatprep.subr.mxu0 0.0
    %902 = vmatpush2.msra.mxu0 0.0
    %903 = vmatprep.subr.mxu0 0.0
    %904 = vmatpush2.msra.mxu0 0.0
    %905 = vmatprep.subr.mxu0 0.0
    %906 = vmatpush2.msra.mxu0 0.0
    %907 = vmatprep.subr.mxu0 0.0
    %908 = vmatpush2.msra.mxu0 0.0
    %909 = vmatprep.subr.mxu0 0.0
    %910 = vmatpush2.msra.mxu0 0.0
    %911 = vmatprep.subr.mxu0 0.0
    %912 = vmatpush2.msra.mxu0 0.0
    %913 = vmatprep.subr.mxu0 0.0
    %914 = vmatpush2.msra.mxu0 0.0
    %915 = vmatprep.subr.mxu0 0.0
    %916 = vmatpush2.msra.mxu0 0.0
    %917 = vmatprep.subr.mxu0 0.0
    %918 = vmatpush2.msra.mxu0 0.0
    %919 = vmatprep.subr.mxu0 0.0
    %920 = vmatpush2.msra.mxu0 0.0
    %921 = vmatprep.subr.mxu0 0.0
    %922 = vmatpush2.msra.mxu0 0.0
    %923 = vmatprep.subr.mxu0 0.0
    %924 = vmatpush2.msra.mxu0 0.0
    %925 = vmatprep.subr.mxu0 0.0
    %926 = vmatpush2.msra.mxu0 0.0
    %927 = vmatprep.subr.mxu0 0.0
    %928 = vmatpush2.msra.mxu0 0.0
    %929 = vmatprep.subr.mxu0 0.0
    %930 = vmatpush2.msra.mxu0 0.0
    %931 = vmatprep.mubr.f32.mxu0 0.0
    %932 = vmatmul.mubr.f32.gmra.mxu0 %v865
    %v933 = vpop.f32.mrf.mxu0
    %v934 = vadd.f32 0.0, %v933
    %v935 = vpop.f32.mrf.mxu0
    %936 = vdwg.mxu0
    %937 = vrot.lane.b32.xlu0 %v134, 56
    %v938 = vpop.permute.xlu0 %937
    %v941 = vsel %vm145, %v854, 0
    %943 = vmatprep.subr.mxu0 0.0
    %944 = vmatpush1.msra.mxu0 0.0
    %945 = vmatprep.subr.mxu0 0.0
    %946 = vmatpush1.msra.mxu0 0.0
    %947 = vmatprep.subr.mxu0 0.0
    %948 = vmatpush1.msra.mxu0 0.0
    %949 = vmatprep.subr.mxu0 0.0
    %950 = vmatpush1.msra.mxu0 0.0
    %951 = vmatprep.subr.mxu0 0.0
    %952 = vmatpush1.msra.mxu0 0.0
    %953 = vmatprep.subr.mxu0 0.0
    %954 = vmatpush1.msra.mxu0 0.0
    %955 = vmatprep.subr.mxu0 0.0
    %956 = vmatpush1.msra.mxu0 0.0
    %957 = vmatprep.subr.mxu0 0.0
    %958 = vmatpush1.msra.mxu0 0.0
    %959 = vmatprep.subr.mxu0 0.0
    %960 = vmatpush1.msra.mxu0 0.0
    %961 = vmatprep.subr.mxu0 0.0
    %962 = vmatpush1.msra.mxu0 0.0
    %963 = vmatprep.subr.mxu0 0.0
    %964 = vmatpush1.msra.mxu0 0.0
    %965 = vmatprep.subr.mxu0 0.0
    %966 = vmatpush1.msra.mxu0 0.0
    %967 = vmatprep.subr.mxu0 0.0
    %968 = vmatpush1.msra.mxu0 0.0
    %969 = vmatprep.subr.mxu0 0.0
    %970 = vmatpush1.msra.mxu0 0.0
    %971 = vmatprep.subr.mxu0 0.0
    %972 = vmatpush1.msra.mxu0 0.0
    %973 = vmatprep.subr.mxu0 0.0
    %974 = vmatpush1.msra.mxu0 %v938
    %975 = vmatprep.subr.mxu0 0.0
    %976 = vmatpush2.msra.mxu0 0.0
    %977 = vmatprep.subr.mxu0 0.0
    %978 = vmatpush2.msra.mxu0 0.0
    %979 = vmatprep.subr.mxu0 0.0
    %980 = vmatpush2.msra.mxu0 0.0
    %981 = vmatprep.subr.mxu0 0.0
    %982 = vmatpush2.msra.mxu0 0.0
    %983 = vmatprep.subr.mxu0 0.0
    %984 = vmatpush2.msra.mxu0 0.0
    %985 = vmatprep.subr.mxu0 0.0
    %986 = vmatpush2.msra.mxu0 0.0
    %987 = vmatprep.subr.mxu0 0.0
    %988 = vmatpush2.msra.mxu0 0.0
    %989 = vmatprep.subr.mxu0 0.0
    %990 = vmatpush2.msra.mxu0 0.0
    %991 = vmatprep.subr.mxu0 0.0
    %992 = vmatpush2.msra.mxu0 0.0
    %993 = vmatprep.subr.mxu0 0.0
    %994 = vmatpush2.msra.mxu0 0.0
    %995 = vmatprep.subr.mxu0 0.0
    %996 = vmatpush2.msra.mxu0 0.0
    %997 = vmatprep.subr.mxu0 0.0
    %998 = vmatpush2.msra.mxu0 0.0
    %999 = vmatprep.subr.mxu0 0.0
    %1000 = vmatpush2.msra.mxu0 0.0
    %1001 = vmatprep.subr.mxu0 0.0
    %1002 = vmatpush2.msra.mxu0 0.0
    %1003 = vmatprep.subr.mxu0 0.0
    %1004 = vmatpush2.msra.mxu0 0.0
    %1005 = vmatprep.subr.mxu0 0.0
    %1006 = vmatpush2.msra.mxu0 0.0
    %1007 = vmatprep.mubr.f32.mxu0 0.0
    %1008 = vmatmul.mubr.f32.gmra.mxu0 %v941
    %v1009 = vpop.f32.mrf.mxu0
    %v1010 = vadd.f32 0.0, %v1009
    %v1011 = vpop.f32.mrf.mxu0
    %1012 = vdwg.mxu0
    %1013 = vrot.lane.b32.xlu0 %v134, 48
    %v1014 = vpop.permute.xlu0 %1013
    %v1017 = vsel %vm145, %v855, 0
    %1019 = vmatprep.subr.mxu0 0.0
    %1020 = vmatpush1.msra.mxu0 0.0
    %1021 = vmatprep.subr.mxu0 0.0
    %1022 = vmatpush1.msra.mxu0 0.0
    %1023 = vmatprep.subr.mxu0 0.0
    %1024 = vmatpush1.msra.mxu0 0.0
    %1025 = vmatprep.subr.mxu0 0.0
    %1026 = vmatpush1.msra.mxu0 0.0
    %1027 = vmatprep.subr.mxu0 0.0
    %1028 = vmatpush1.msra.mxu0 0.0
    %1029 = vmatprep.subr.mxu0 0.0
    %1030 = vmatpush1.msra.mxu0 0.0
    %1031 = vmatprep.subr.mxu0 0.0
    %1032 = vmatpush1.msra.mxu0 0.0
    %1033 = vmatprep.subr.mxu0 0.0
    %1034 = vmatpush1.msra.mxu0 0.0
    %1035 = vmatprep.subr.mxu0 0.0
    %1036 = vmatpush1.msra.mxu0 0.0
    %1037 = vmatprep.subr.mxu0 0.0
    %1038 = vmatpush1.msra.mxu0 0.0
    %1039 = vmatprep.subr.mxu0 0.0
    %1040 = vmatpush1.msra.mxu0 0.0
    %1041 = vmatprep.subr.mxu0 0.0
    %1042 = vmatpush1.msra.mxu0 0.0
    %1043 = vmatprep.subr.mxu0 0.0
    %1044 = vmatpush1.msra.mxu0 0.0
    %1045 = vmatprep.subr.mxu0 0.0
    %1046 = vmatpush1.msra.mxu0 0.0
    %1047 = vmatprep.subr.mxu0 0.0
    %1048 = vmatpush1.msra.mxu0 0.0
    %1049 = vmatprep.subr.mxu0 0.0
    %1050 = vmatpush1.msra.mxu0 %v1014
    %1051 = vmatprep.subr.mxu0 0.0
    %1052 = vmatpush2.msra.mxu0 0.0
    %1053 = vmatprep.subr.mxu0 0.0
    %1054 = vmatpush2.msra.mxu0 0.0
    %1055 = vmatprep.subr.mxu0 0.0
    %1056 = vmatpush2.msra.mxu0 0.0
    %1057 = vmatprep.subr.mxu0 0.0
    %1058 = vmatpush2.msra.mxu0 0.0
    %1059 = vmatprep.subr.mxu0 0.0
    %1060 = vmatpush2.msra.mxu0 0.0
    %1061 = vmatprep.subr.mxu0 0.0
    %1062 = vmatpush2.msra.mxu0 0.0
    %1063 = vmatprep.subr.mxu0 0.0
    %1064 = vmatpush2.msra.mxu0 0.0
    %1065 = vmatprep.subr.mxu0 0.0
    %1066 = vmatpush2.msra.mxu0 0.0
    %1067 = vmatprep.subr.mxu0 0.0
    %1068 = vmatpush2.msra.mxu0 0.0
    %1069 = vmatprep.subr.mxu0 0.0
    %1070 = vmatpush2.msra.mxu0 0.0
    %1071 = vmatprep.subr.mxu0 0.0
    %1072 = vmatpush2.msra.mxu0 0.0
    %1073 = vmatprep.subr.mxu0 0.0
    %1074 = vmatpush2.msra.mxu0 0.0
    %1075 = vmatprep.subr.mxu0 0.0
    %1076 = vmatpush2.msra.mxu0 0.0
    %1077 = vmatprep.subr.mxu0 0.0
    %1078 = vmatpush2.msra.mxu0 0.0
    %1079 = vmatprep.subr.mxu0 0.0
    %1080 = vmatpush2.msra.mxu0 0.0
    %1081 = vmatprep.subr.mxu0 0.0
    %1082 = vmatpush2.msra.mxu0 0.0
    %1083 = vmatprep.mubr.f32.mxu0 0.0
    %1084 = vmatmul.mubr.f32.gmra.mxu0 %v1017
    %v1085 = vpop.f32.mrf.mxu0
    %v1086 = vadd.f32 0.0, %v1085
    %v1087 = vpop.f32.mrf.mxu0
    %1088 = vdwg.mxu0
    %1089 = vrot.lane.b32.xlu0 %v134, 40
    %v1090 = vpop.permute.xlu0 %1089
    %v1093 = vsel %vm145, %v856, 0
    %1095 = vmatprep.subr.mxu0 0.0
    %1096 = vmatpush1.msra.mxu0 0.0
    %1097 = vmatprep.subr.mxu0 0.0
    %1098 = vmatpush1.msra.mxu0 0.0
    %1099 = vmatprep.subr.mxu0 0.0
    %1100 = vmatpush1.msra.mxu0 0.0
    %1101 = vmatprep.subr.mxu0 0.0
    %1102 = vmatpush1.msra.mxu0 0.0
    %1103 = vmatprep.subr.mxu0 0.0
    %1104 = vmatpush1.msra.mxu0 0.0
    %1105 = vmatprep.subr.mxu0 0.0
    %1106 = vmatpush1.msra.mxu0 0.0
    %1107 = vmatprep.subr.mxu0 0.0
    %1108 = vmatpush1.msra.mxu0 0.0
    %1109 = vmatprep.subr.mxu0 0.0
    %1110 = vmatpush1.msra.mxu0 0.0
    %1111 = vmatprep.subr.mxu0 0.0
    %1112 = vmatpush1.msra.mxu0 0.0
    %1113 = vmatprep.subr.mxu0 0.0
    %1114 = vmatpush1.msra.mxu0 0.0
    %1115 = vmatprep.subr.mxu0 0.0
    %1116 = vmatpush1.msra.mxu0 0.0
    %1117 = vmatprep.subr.mxu0 0.0
    %1118 = vmatpush1.msra.mxu0 0.0
    %1119 = vmatprep.subr.mxu0 0.0
    %1120 = vmatpush1.msra.mxu0 0.0
    %1121 = vmatprep.subr.mxu0 0.0
    %1122 = vmatpush1.msra.mxu0 0.0
    %1123 = vmatprep.subr.mxu0 0.0
    %1124 = vmatpush1.msra.mxu0 0.0
    %1125 = vmatprep.subr.mxu0 0.0
    %1126 = vmatpush1.msra.mxu0 %v1090
    %1127 = vmatprep.subr.mxu0 0.0
    %1128 = vmatpush2.msra.mxu0 0.0
    %1129 = vmatprep.subr.mxu0 0.0
    %1130 = vmatpush2.msra.mxu0 0.0
    %1131 = vmatprep.subr.mxu0 0.0
    %1132 = vmatpush2.msra.mxu0 0.0
    %1133 = vmatprep.subr.mxu0 0.0
    %1134 = vmatpush2.msra.mxu0 0.0
    %1135 = vmatprep.subr.mxu0 0.0
    %1136 = vmatpush2.msra.mxu0 0.0
    %1137 = vmatprep.subr.mxu0 0.0
    %1138 = vmatpush2.msra.mxu0 0.0
    %1139 = vmatprep.subr.mxu0 0.0
    %1140 = vmatpush2.msra.mxu0 0.0
    %1141 = vmatprep.subr.mxu0 0.0
    %1142 = vmatpush2.msra.mxu0 0.0
    %1143 = vmatprep.subr.mxu0 0.0
    %1144 = vmatpush2.msra.mxu0 0.0
    %1145 = vmatprep.subr.mxu0 0.0
    %1146 = vmatpush2.msra.mxu0 0.0
    %1147 = vmatprep.subr.mxu0 0.0
    %1148 = vmatpush2.msra.mxu0 0.0
    %1149 = vmatprep.subr.mxu0 0.0
    %1150 = vmatpush2.msra.mxu0 0.0
    %1151 = vmatprep.subr.mxu0 0.0
    %1152 = vmatpush2.msra.mxu0 0.0
    %1153 = vmatprep.subr.mxu0 0.0
    %1154 = vmatpush2.msra.mxu0 0.0
    %1155 = vmatprep.subr.mxu0 0.0
    %1156 = vmatpush2.msra.mxu0 0.0
    %1157 = vmatprep.subr.mxu0 0.0
    %1158 = vmatpush2.msra.mxu0 0.0
    %1159 = vmatprep.mubr.f32.mxu0 0.0
    %1160 = vmatmul.mubr.f32.gmra.mxu0 %v1093
    %v1161 = vpop.f32.mrf.mxu0
    %v1162 = vadd.f32 0.0, %v1161
    %v1163 = vpop.f32.mrf.mxu0
    %1164 = vdwg.mxu0
    %1166 = vrot.lane.b32.xlu0 %v1010, 8
    %v1167 = vpop.permute.xlu0 %1166
    %1170 = vrot.lane.b32.xlu0 %v1086, 16
    %v1171 = vpop.permute.xlu0 %1170
    %1174 = vrot.lane.b32.xlu0 %v1162, 24
    %v1175 = vpop.permute.xlu0 %1174
    %v1177 = vsel %vm145, %v934, %v1167
    %vm1178 = vcmask 130048
    %v1179 = vsel %vm1178, %v1177, %v1171
    %vm1180 = vcmask 195584
    %v1181 = vsel %vm1180, %v1179, %v1175
    %1182 = vrot.lane.b32.xlu0 %v139, 64
    %v1183 = vpop.permute.xlu0 %1182
    %v1186 = vsel %vm145, %v857, 0
    %1188 = vmatprep.subr.mxu0 0.0
    %1189 = vmatpush1.msra.mxu0 0.0
    %1190 = vmatprep.subr.mxu0 0.0
    %1191 = vmatpush1.msra.mxu0 0.0
    %1192 = vmatprep.subr.mxu0 0.0
    %1193 = vmatpush1.msra.mxu0 0.0
    %1194 = vmatprep.subr.mxu0 0.0
    %1195 = vmatpush1.msra.mxu0 0.0
    %1196 = vmatprep.subr.mxu0 0.0
    %1197 = vmatpush1.msra.mxu0 0.0
    %1198 = vmatprep.subr.mxu0 0.0
    %1199 = vmatpush1.msra.mxu0 0.0
    %1200 = vmatprep.subr.mxu0 0.0
    %1201 = vmatpush1.msra.mxu0 0.0
    %1202 = vmatprep.subr.mxu0 0.0
    %1203 = vmatpush1.msra.mxu0 0.0
    %1204 = vmatprep.subr.mxu0 0.0
    %1205 = vmatpush1.msra.mxu0 0.0
    %1206 = vmatprep.subr.mxu0 0.0
    %1207 = vmatpush1.msra.mxu0 0.0
    %1208 = vmatprep.subr.mxu0 0.0
    %1209 = vmatpush1.msra.mxu0 0.0
    %1210 = vmatprep.subr.mxu0 0.0
    %1211 = vmatpush1.msra.mxu0 0.0
    %1212 = vmatprep.subr.mxu0 0.0
    %1213 = vmatpush1.msra.mxu0 0.0
    %1214 = vmatprep.subr.mxu0 0.0
    %1215 = vmatpush1.msra.mxu0 0.0
    %1216 = vmatprep.subr.mxu0 0.0
    %1217 = vmatpush1.msra.mxu0 0.0
    %1218 = vmatprep.subr.mxu0 0.0
    %1219 = vmatpush1.msra.mxu0 %v1183
    %1220 = vmatprep.subr.mxu0 0.0
    %1221 = vmatpush2.msra.mxu0 0.0
    %1222 = vmatprep.subr.mxu0 0.0
    %1223 = vmatpush2.msra.mxu0 0.0
    %1224 = vmatprep.subr.mxu0 0.0
    %1225 = vmatpush2.msra.mxu0 0.0
    %1226 = vmatprep.subr.mxu0 0.0
    %1227 = vmatpush2.msra.mxu0 0.0
    %1228 = vmatprep.subr.mxu0 0.0
    %1229 = vmatpush2.msra.mxu0 0.0
    %1230 = vmatprep.subr.mxu0 0.0
    %1231 = vmatpush2.msra.mxu0 0.0
    %1232 = vmatprep.subr.mxu0 0.0
    %1233 = vmatpush2.msra.mxu0 0.0
    %1234 = vmatprep.subr.mxu0 0.0
    %1235 = vmatpush2.msra.mxu0 0.0
    %1236 = vmatprep.subr.mxu0 0.0
    %1237 = vmatpush2.msra.mxu0 0.0
    %1238 = vmatprep.subr.mxu0 0.0
    %1239 = vmatpush2.msra.mxu0 0.0
    %1240 = vmatprep.subr.mxu0 0.0
    %1241 = vmatpush2.msra.mxu0 0.0
    %1242 = vmatprep.subr.mxu0 0.0
    %1243 = vmatpush2.msra.mxu0 0.0
    %1244 = vmatprep.subr.mxu0 0.0
    %1245 = vmatpush2.msra.mxu0 0.0
    %1246 = vmatprep.subr.mxu0 0.0
    %1247 = vmatpush2.msra.mxu0 0.0
    %1248 = vmatprep.subr.mxu0 0.0
    %1249 = vmatpush2.msra.mxu0 0.0
    %1250 = vmatprep.subr.mxu0 0.0
    %1251 = vmatpush2.msra.mxu0 0.0
    %1252 = vmatprep.mubr.f32.mxu0 0.0
    %1253 = vmatmul.mubr.f32.gmra.mxu0 %v1186
    %v1254 = vpop.f32.mrf.mxu0
    %v1255 = vadd.f32 0.0, %v1254
    %v1256 = vpop.f32.mrf.mxu0
    %1257 = vdwg.mxu0
    %1258 = vrot.lane.b32.xlu0 %v139, 56
    %v1259 = vpop.permute.xlu0 %1258
    %v1262 = vsel %vm145, %v858, 0
    %1264 = vmatprep.subr.mxu0 0.0
    %1265 = vmatpush1.msra.mxu0 0.0
    %1266 = vmatprep.subr.mxu0 0.0
    %1267 = vmatpush1.msra.mxu0 0.0
    %1268 = vmatprep.subr.mxu0 0.0
    %1269 = vmatpush1.msra.mxu0 0.0
    %1270 = vmatprep.subr.mxu0 0.0
    %1271 = vmatpush1.msra.mxu0 0.0
    %1272 = vmatprep.subr.mxu0 0.0
    %1273 = vmatpush1.msra.mxu0 0.0
    %1274 = vmatprep.subr.mxu0 0.0
    %1275 = vmatpush1.msra.mxu0 0.0
    %1276 = vmatprep.subr.mxu0 0.0
    %1277 = vmatpush1.msra.mxu0 0.0
    %1278 = vmatprep.subr.mxu0 0.0
    %1279 = vmatpush1.msra.mxu0 0.0
    %1280 = vmatprep.subr.mxu0 0.0
    %1281 = vmatpush1.msra.mxu0 0.0
    %1282 = vmatprep.subr.mxu0 0.0
    %1283 = vmatpush1.msra.mxu0 0.0
    %1284 = vmatprep.subr.mxu0 0.0
    %1285 = vmatpush1.msra.mxu0 0.0
    %1286 = vmatprep.subr.mxu0 0.0
    %1287 = vmatpush1.msra.mxu0 0.0
    %1288 = vmatprep.subr.mxu0 0.0
    %1289 = vmatpush1.msra.mxu0 0.0
    %1290 = vmatprep.subr.mxu0 0.0
    %1291 = vmatpush1.msra.mxu0 0.0
    %1292 = vmatprep.subr.mxu0 0.0
    %1293 = vmatpush1.msra.mxu0 0.0
    %1294 = vmatprep.subr.mxu0 0.0
    %1295 = vmatpush1.msra.mxu0 %v1259
    %1296 = vmatprep.subr.mxu0 0.0
    %1297 = vmatpush2.msra.mxu0 0.0
    %1298 = vmatprep.subr.mxu0 0.0
    %1299 = vmatpush2.msra.mxu0 0.0
    %1300 = vmatprep.subr.mxu0 0.0
    %1301 = vmatpush2.msra.mxu0 0.0
    %1302 = vmatprep.subr.mxu0 0.0
    %1303 = vmatpush2.msra.mxu0 0.0
    %1304 = vmatprep.subr.mxu0 0.0
    %1305 = vmatpush2.msra.mxu0 0.0
    %1306 = vmatprep.subr.mxu0 0.0
    %1307 = vmatpush2.msra.mxu0 0.0
    %1308 = vmatprep.subr.mxu0 0.0
    %1309 = vmatpush2.msra.mxu0 0.0
    %1310 = vmatprep.subr.mxu0 0.0
    %1311 = vmatpush2.msra.mxu0 0.0
    %1312 = vmatprep.subr.mxu0 0.0
    %1313 = vmatpush2.msra.mxu0 0.0
    %1314 = vmatprep.subr.mxu0 0.0
    %1315 = vmatpush2.msra.mxu0 0.0
    %1316 = vmatprep.subr.mxu0 0.0
    %1317 = vmatpush2.msra.mxu0 0.0
    %1318 = vmatprep.subr.mxu0 0.0
    %1319 = vmatpush2.msra.mxu0 0.0
    %1320 = vmatprep.subr.mxu0 0.0
    %1321 = vmatpush2.msra.mxu0 0.0
    %1322 = vmatprep.subr.mxu0 0.0
    %1323 = vmatpush2.msra.mxu0 0.0
    %1324 = vmatprep.subr.mxu0 0.0
    %1325 = vmatpush2.msra.mxu0 0.0
    %1326 = vmatprep.subr.mxu0 0.0
    %1327 = vmatpush2.msra.mxu0 0.0
    %1328 = vmatprep.mubr.f32.mxu0 0.0
    %1329 = vmatmul.mubr.f32.gmra.mxu0 %v1262
    %v1330 = vpop.f32.mrf.mxu0
    %v1331 = vadd.f32 0.0, %v1330
    %v1332 = vpop.f32.mrf.mxu0
    %1333 = vdwg.mxu0
    %1334 = vrot.lane.b32.xlu0 %v139, 48
    %v1335 = vpop.permute.xlu0 %1334
    %v1338 = vsel %vm145, %v859, 0
    %1340 = vmatprep.subr.mxu0 0.0
    %1341 = vmatpush1.msra.mxu0 0.0
    %1342 = vmatprep.subr.mxu0 0.0
    %1343 = vmatpush1.msra.mxu0 0.0
    %1344 = vmatprep.subr.mxu0 0.0
    %1345 = vmatpush1.msra.mxu0 0.0
    %1346 = vmatprep.subr.mxu0 0.0
    %1347 = vmatpush1.msra.mxu0 0.0
    %1348 = vmatprep.subr.mxu0 0.0
    %1349 = vmatpush1.msra.mxu0 0.0
    %1350 = vmatprep.subr.mxu0 0.0
    %1351 = vmatpush1.msra.mxu0 0.0
    %1352 = vmatprep.subr.mxu0 0.0
    %1353 = vmatpush1.msra.mxu0 0.0
    %1354 = vmatprep.subr.mxu0 0.0
    %1355 = vmatpush1.msra.mxu0 0.0
    %1356 = vmatprep.subr.mxu0 0.0
    %1357 = vmatpush1.msra.mxu0 0.0
    %1358 = vmatprep.subr.mxu0 0.0
    %1359 = vmatpush1.msra.mxu0 0.0
    %1360 = vmatprep.subr.mxu0 0.0
    %1361 = vmatpush1.msra.mxu0 0.0
    %1362 = vmatprep.subr.mxu0 0.0
    %1363 = vmatpush1.msra.mxu0 0.0
    %1364 = vmatprep.subr.mxu0 0.0
    %1365 = vmatpush1.msra.mxu0 0.0
    %1366 = vmatprep.subr.mxu0 0.0
    %1367 = vmatpush1.msra.mxu0 0.0
    %1368 = vmatprep.subr.mxu0 0.0
    %1369 = vmatpush1.msra.mxu0 0.0
    %1370 = vmatprep.subr.mxu0 0.0
    %1371 = vmatpush1.msra.mxu0 %v1335
    %1372 = vmatprep.subr.mxu0 0.0
    %1373 = vmatpush2.msra.mxu0 0.0
    %1374 = vmatprep.subr.mxu0 0.0
    %1375 = vmatpush2.msra.mxu0 0.0
    %1376 = vmatprep.subr.mxu0 0.0
    %1377 = vmatpush2.msra.mxu0 0.0
    %1378 = vmatprep.subr.mxu0 0.0
    %1379 = vmatpush2.msra.mxu0 0.0
    %1380 = vmatprep.subr.mxu0 0.0
    %1381 = vmatpush2.msra.mxu0 0.0
    %1382 = vmatprep.subr.mxu0 0.0
    %1383 = vmatpush2.msra.mxu0 0.0
    %1384 = vmatprep.subr.mxu0 0.0
    %1385 = vmatpush2.msra.mxu0 0.0
    %1386 = vmatprep.subr.mxu0 0.0
    %1387 = vmatpush2.msra.mxu0 0.0
    %1388 = vmatprep.subr.mxu0 0.0
    %1389 = vmatpush2.msra.mxu0 0.0
    %1390 = vmatprep.subr.mxu0 0.0
    %1391 = vmatpush2.msra.mxu0 0.0
    %1392 = vmatprep.subr.mxu0 0.0
    %1393 = vmatpush2.msra.mxu0 0.0
    %1394 = vmatprep.subr.mxu0 0.0
    %1395 = vmatpush2.msra.mxu0 0.0
    %1396 = vmatprep.subr.mxu0 0.0
    %1397 = vmatpush2.msra.mxu0 0.0
    %1398 = vmatprep.subr.mxu0 0.0
    %1399 = vmatpush2.msra.mxu0 0.0
    %1400 = vmatprep.subr.mxu0 0.0
    %1401 = vmatpush2.msra.mxu0 0.0
    %1402 = vmatprep.subr.mxu0 0.0
    %1403 = vmatpush2.msra.mxu0 0.0
    %1404 = vmatprep.mubr.f32.mxu0 0.0
    %1405 = vmatmul.mubr.f32.gmra.mxu0 %v1338
    %v1406 = vpop.f32.mrf.mxu0
    %v1407 = vadd.f32 0.0, %v1406
    %v1408 = vpop.f32.mrf.mxu0
    %1409 = vdwg.mxu0
    %1410 = vrot.lane.b32.xlu0 %v139, 40
    %v1411 = vpop.permute.xlu0 %1410
    %v1414 = vsel %vm145, %v860, 0
    %1416 = vmatprep.subr.mxu0 0.0
    %1417 = vmatpush1.msra.mxu0 0.0
    %1418 = vmatprep.subr.mxu0 0.0
    %1419 = vmatpush1.msra.mxu0 0.0
    %1420 = vmatprep.subr.mxu0 0.0
    %1421 = vmatpush1.msra.mxu0 0.0
    %1422 = vmatprep.subr.mxu0 0.0
    %1423 = vmatpush1.msra.mxu0 0.0
    %1424 = vmatprep.subr.mxu0 0.0
    %1425 = vmatpush1.msra.mxu0 0.0
    %1426 = vmatprep.subr.mxu0 0.0
    %1427 = vmatpush1.msra.mxu0 0.0
    %1428 = vmatprep.subr.mxu0 0.0
    %1429 = vmatpush1.msra.mxu0 0.0
    %1430 = vmatprep.subr.mxu0 0.0
    %1431 = vmatpush1.msra.mxu0 0.0
    %1432 = vmatprep.subr.mxu0 0.0
    %1433 = vmatpush1.msra.mxu0 0.0
    %1434 = vmatprep.subr.mxu0 0.0
    %1435 = vmatpush1.msra.mxu0 0.0
    %1436 = vmatprep.subr.mxu0 0.0
    %1437 = vmatpush1.msra.mxu0 0.0
    %1438 = vmatprep.subr.mxu0 0.0
    %1439 = vmatpush1.msra.mxu0 0.0
    %1440 = vmatprep.subr.mxu0 0.0
    %1441 = vmatpush1.msra.mxu0 0.0
    %1442 = vmatprep.subr.mxu0 0.0
    %1443 = vmatpush1.msra.mxu0 0.0
    %1444 = vmatprep.subr.mxu0 0.0
    %1445 = vmatpush1.msra.mxu0 0.0
    %1446 = vmatprep.subr.mxu0 0.0
    %1447 = vmatpush1.msra.mxu0 %v1411
    %1448 = vmatprep.subr.mxu0 0.0
    %1449 = vmatpush2.msra.mxu0 0.0
    %1450 = vmatprep.subr.mxu0 0.0
    %1451 = vmatpush2.msra.mxu0 0.0
    %1452 = vmatprep.subr.mxu0 0.0
    %1453 = vmatpush2.msra.mxu0 0.0
    %1454 = vmatprep.subr.mxu0 0.0
    %1455 = vmatpush2.msra.mxu0 0.0
    %1456 = vmatprep.subr.mxu0 0.0
    %1457 = vmatpush2.msra.mxu0 0.0
    %1458 = vmatprep.subr.mxu0 0.0
    %1459 = vmatpush2.msra.mxu0 0.0
    %1460 = vmatprep.subr.mxu0 0.0
    %1461 = vmatpush2.msra.mxu0 0.0
    %1462 = vmatprep.subr.mxu0 0.0
    %1463 = vmatpush2.msra.mxu0 0.0
    %1464 = vmatprep.subr.mxu0 0.0
    %1465 = vmatpush2.msra.mxu0 0.0
    %1466 = vmatprep.subr.mxu0 0.0
    %1467 = vmatpush2.msra.mxu0 0.0
    %1468 = vmatprep.subr.mxu0 0.0
    %1469 = vmatpush2.msra.mxu0 0.0
    %1470 = vmatprep.subr.mxu0 0.0
    %1471 = vmatpush2.msra.mxu0 0.0
    %1472 = vmatprep.subr.mxu0 0.0
    %1473 = vmatpush2.msra.mxu0 0.0
    %1474 = vmatprep.subr.mxu0 0.0
    %1475 = vmatpush2.msra.mxu0 0.0
    %1476 = vmatprep.subr.mxu0 0.0
    %1477 = vmatpush2.msra.mxu0 0.0
    %1478 = vmatprep.subr.mxu0 0.0
    %1479 = vmatpush2.msra.mxu0 0.0
    %1480 = vmatprep.mubr.f32.mxu0 0.0
    %1481 = vmatmul.mubr.f32.gmra.mxu0 %v1414
    %v1482 = vpop.f32.mrf.mxu0
    %v1483 = vadd.f32 0.0, %v1482
    %v1484 = vpop.f32.mrf.mxu0
    %1485 = vdwg.mxu0
    %1487 = vrot.lane.b32.xlu0 %v1331, 8
    %v1488 = vpop.permute.xlu0 %1487
    %1491 = vrot.lane.b32.xlu0 %v1407, 16
    %v1492 = vpop.permute.xlu0 %1491
    %1495 = vrot.lane.b32.xlu0 %v1483, 24
    %v1496 = vpop.permute.xlu0 %1495
    %v1498 = vsel %vm145, %v1255, %v1488
    %v1499 = vsel %vm1178, %v1498, %v1492
    %v1500 = vsel %vm1180, %v1499, %v1496
    %v1501 = vld [vmem:[%s5] sm:$0xff]
    %v1502 = vld [vmem:[%s5 + $0x8] sm:$0xff]
    %v1503 = vld [vmem:[%s5 + $0x10] sm:$0xff]
    %v1504 = vld [vmem:[%s5 + $0x18] sm:$0xff]
    %v1505 = vld [vmem:[%s6] sm:$0x1]
    %v1507 = vlaneseq
    %v1508 = vshrl.u32 %v1507, 7
    %v1509 = vsub.s32 0, %v1508
    %v1510 = vrot.slane %v1505, %v1509
    %v1513 = vsel %vm60, %v1181, 0
    %v1516 = vsel %vm60, %v1500, 0
    %1518 = vmatprep.subr.mxu0 0.0
    %1519 = vmatpush1.msra.mxu0 0.0
    %1520 = vmatprep.subr.mxu0 0.0
    %1521 = vmatpush1.msra.mxu0 0.0
    %1522 = vmatprep.subr.mxu0 0.0
    %1523 = vmatpush1.msra.mxu0 0.0
    %1524 = vmatprep.subr.mxu0 0.0
    %1525 = vmatpush1.msra.mxu0 0.0
    %1526 = vmatprep.subr.mxu0 0.0
    %1527 = vmatpush1.msra.mxu0 0.0
    %1528 = vmatprep.subr.mxu0 0.0
    %1529 = vmatpush1.msra.mxu0 0.0
    %1530 = vmatprep.subr.mxu0 0.0
    %1531 = vmatpush1.msra.mxu0 0.0
    %1532 = vmatprep.subr.mxu0 0.0
    %1533 = vmatpush1.msra.mxu0 0.0
    %1534 = vmatprep.subr.mxu0 0.0
    %1535 = vmatpush1.msra.mxu0 0.0
    %1536 = vmatprep.subr.mxu0 0.0
    %1537 = vmatpush1.msra.mxu0 0.0
    %1538 = vmatprep.subr.mxu0 0.0
    %1539 = vmatpush1.msra.mxu0 0.0
    %1540 = vmatprep.subr.mxu0 0.0
    %1541 = vmatpush1.msra.mxu0 0.0
    %1542 = vmatprep.subr.mxu0 0.0
    %1543 = vmatpush1.msra.mxu0 %v1504
    %1544 = vmatprep.subr.mxu0 0.0
    %1545 = vmatpush1.msra.mxu0 %v1503
    %1546 = vmatprep.subr.mxu0 0.0
    %1547 = vmatpush1.msra.mxu0 %v1502
    %1548 = vmatprep.subr.mxu0 0.0
    %1549 = vmatpush1.msra.mxu0 %v1501
    %1550 = vmatprep.subr.mxu0 0.0
    %1551 = vmatpush2.msra.mxu0 0.0
    %1552 = vmatprep.subr.mxu0 0.0
    %1553 = vmatpush2.msra.mxu0 0.0
    %1554 = vmatprep.subr.mxu0 0.0
    %1555 = vmatpush2.msra.mxu0 0.0
    %1556 = vmatprep.subr.mxu0 0.0
    %1557 = vmatpush2.msra.mxu0 0.0
    %1558 = vmatprep.subr.mxu0 0.0
    %1559 = vmatpush2.msra.mxu0 0.0
    %1560 = vmatprep.subr.mxu0 0.0
    %1561 = vmatpush2.msra.mxu0 0.0
    %1562 = vmatprep.subr.mxu0 0.0
    %1563 = vmatpush2.msra.mxu0 0.0
    %1564 = vmatprep.subr.mxu0 0.0
    %1565 = vmatpush2.msra.mxu0 0.0
    %1566 = vmatprep.subr.mxu0 0.0
    %1567 = vmatpush2.msra.mxu0 0.0
    %1568 = vmatprep.subr.mxu0 0.0
    %1569 = vmatpush2.msra.mxu0 0.0
    %1570 = vmatprep.subr.mxu0 0.0
    %1571 = vmatpush2.msra.mxu0 0.0
    %1572 = vmatprep.subr.mxu0 0.0
    %1573 = vmatpush2.msra.mxu0 0.0
    %1574 = vmatprep.subr.mxu0 0.0
    %1575 = vmatpush2.msra.mxu0 0.0
    %1576 = vmatprep.subr.mxu0 0.0
    %1577 = vmatpush2.msra.mxu0 0.0
    %1578 = vmatprep.subr.mxu0 0.0
    %1579 = vmatpush2.msra.mxu0 0.0
    %1580 = vmatprep.subr.mxu0 0.0
    %1581 = vmatpush2.msra.mxu0 0.0
    %1582 = vmatprep.mubr.f32.mxu0 0.0
    %1583 = vmatmul.mubr.f32.gmra.mxu0 %v1513
    %v1584 = vpop.f32.mrf.mxu0
    %v1585 = vadd.f32 %v1510, %v1584
    %v1586 = vpop.f32.mrf.mxu0
    %1587 = vmatprep.mubr.f32.mxu0 0.0
    %1588 = vmatmul.mubr.f32.gmra.mxu0 %v1516
    %v1589 = vpop.f32.mrf.mxu0
    %v1590 = vadd.f32 %v1510, %v1589
    %v1591 = vpop.f32.mrf.mxu0
    %1592 = vdwg.mxu0
    %v1593 = vadd.f32 %v45, %v1585
    %v1594 = vadd.f32 %v46, %v1590
    %v1595 = vsel %vm60, %v1593, 0.0
    %1596 = vadd.xlane.f32.xlu0 %v1595
    %v1597 = vpop.xlane.xlu0 %1596
    %v1598 = vsel %vm60, %v1594, 0.0
    %1599 = vadd.xlane.f32.xlu0 %v1598
    %v1600 = vpop.xlane.xlu0 %1599
    %v1601 = vrcp.pop 32.0
    %v1602 = vmul.f32 %v1597, %v1601
    %v1603 = vmul.f32 %v1600, %v1601
    %v1604 = vsub.f32 %v1593, %v1602
    %v1605 = vsub.f32 %v1594, %v1603
    %v1606 = vmul.f32 %v1604, %v1604
    %v1607 = vmul.f32 %v1605, %v1605
    %v1608 = vsel %vm60, %v1606, 0.0
    %1609 = vadd.xlane.f32.xlu0 %v1608
    %v1610 = vpop.xlane.xlu0 %1609
    %v1611 = vsel %vm60, %v1607, 0.0
    %1612 = vadd.xlane.f32.xlu0 %v1611
    %v1613 = vpop.xlane.xlu0 %1612
    %v1614 = vmul.f32 %v1610, %v1601
    %v1615 = vmul.f32 %v1613, %v1601
    %v1616 = vadd.f32 %v1614, 1e-05
    %v1617 = vadd.f32 %v1615, 1e-05
    %v1618 = vrsqrt.pop %v1616
    %v1619 = vrsqrt.pop %v1617
    %v1620 = vmul.f32 %v1604, %v1618
    %v1621 = vmul.f32 %v1605, %v1619
    %v1622 = vld [vmem:[%s7] sm:$0x1]
    %v1624 = vlaneseq
    %v1625 = vshrl.u32 %v1624, 7
    %v1626 = vsub.s32 0, %v1625
    %v1627 = vrot.slane %v1622, %v1626
    %v1629 = vmul.f32 %v1620, %v1627
    %v1630 = vmul.f32 %v1621, %v1627
    %v1631 = vld [vmem:[%s8] sm:$0x1]
    %v1633 = vlaneseq
    %v1634 = vshrl.u32 %v1633, 7
    %v1635 = vsub.s32 0, %v1634
    %v1636 = vrot.slane %v1631, %v1635
    %v1638 = vadd.f32 %v1629, %v1636
    %v1639 = vadd.f32 %v1630, %v1636
    %v1640 = vld [vmem:[%s2] sm:$0xff]
    %v1641 = vld [vmem:[%s2 + $0x8] sm:$0xff]
    %v1642 = vld [vmem:[%s10] sm:$0x1]
    %v1643 = vrot.slane %v1638, 7
    %v1644 = vrot.slane %v1639, 7
    %v1645 = vlaneseq
    %v1646 = vshrl.u32 %v1645, 7
    %vm1647 = vcmp.lt.s32.totalorder %v1646, 1
    %v1648 = vsel %vm1647, %v1643, %v1644
    %v1649 = vsel %vm1647, %v1644, %v1643
    %1651 = vset.pattern.permute.xlu0 0
    %1652 = vperm.xlu0 %1651, %v1640
    %v1653 = vpop.permute.xlu0 %1652
    %1656 = vset.pattern.permute.xlu0 0
    %1657 = vperm.xlu0 %1656, %v1641
    %v1658 = vpop.permute.xlu0 %1657
    %v1660 = vmul.f32 %v1649, %v1653
    %v1661 = vmul.f32 %v1648, %v1658
    %v1662 = vrot.slane %v1638, 1
    %v1663 = vrot.slane %v1639, 1
    %vm1664 = vcmp.lt.s32.totalorder %v1646, 7
    %v1665 = vsel %vm1664, %v1662, %v1663
    %v1666 = vsel %vm1664, %v1663, %v1662
    %1667 = vset.pattern.permute.xlu0 1
    %1668 = vperm.xlu0 %1667, %v1640
    %v1669 = vpop.permute.xlu0 %1668
    %1671 = vset.pattern.permute.xlu0 1
    %1672 = vperm.xlu0 %1671, %v1641
    %v1673 = vpop.permute.xlu0 %1672
    %v1675 = vmul.f32 %v1665, %v1669
    %v1676 = vmul.f32 %v1666, %v1673
    %1679 = vrot.lane.b32.xlu0 %v1638, 32
    %v1680 = vpop.permute.xlu0 %1679
    %1681 = vrot.lane.b32.xlu0 %v1639, 32
    %v1682 = vpop.permute.xlu0 %1681
    %1687 = vrot.lane.b32.xlu0 %v1675, 64
    %v1688 = vpop.permute.xlu0 %1687
    %1689 = vrot.lane.b32.xlu0 %v1676, 64
    %v1690 = vpop.permute.xlu0 %1689
    %v1693 = vsel %vm60, %v1660, %v1680
    %v1694 = vsel %vm60, %v1661, %v1682
    %vm1695 = vcmask 523264
    %v1696 = vsel %vm1695, %v1693, %v1688
    %v1697 = vsel %vm1695, %v1694, %v1690
    %v1698 = vld [vmem:[%s9] sm:$0xff]
    %v1699 = vld [vmem:[%s9 + $0x8] sm:$0xff]
    %v1700 = vld [vmem:[%s9 + $0x10] sm:$0xff]
    %v1701 = vld [vmem:[%s9 + $0x18] sm:$0xff]
    %v1702 = vld [vmem:[%s9 + $0x20] sm:$0xff]
    %v1703 = vld [vmem:[%s9 + $0x28] sm:$0xff]
    %v1704 = vld [vmem:[%s9 + $0x30] sm:$0xff]
    %v1705 = vld [vmem:[%s9 + $0x38] sm:$0xff]
    %v1706 = vld [vmem:[%s9 + $0x40] sm:$0xff]
    %v1707 = vld [vmem:[%s9 + $0x48] sm:$0xff]
    %v1708 = vld [vmem:[%s9 + $0x50] sm:$0xff]
    %v1709 = vld [vmem:[%s9 + $0x58] sm:$0xff]
    %v1711 = vlaneseq
    %v1712 = vshrl.u32 %v1711, 7
    %v1713 = vsub.s32 0, %v1712
    %v1714 = vrot.slane %v1642, %v1713
    %vm1716 = vcmask 785408
    %v1718 = vsel %vm1716, %v1696, 0
    %v1721 = vsel %vm1716, %v1697, 0
    %1723 = vmatprep.subr.mxu0 0.0
    %1724 = vmatpush1.msra.mxu0 0.0
    %1725 = vmatprep.subr.mxu0 0.0
    %1726 = vmatpush1.msra.mxu0 0.0
    %1727 = vmatprep.subr.mxu0 0.0
    %1728 = vmatpush1.msra.mxu0 0.0
    %1729 = vmatprep.subr.mxu0 0.0
    %1730 = vmatpush1.msra.mxu0 0.0
    %1731 = vmatprep.subr.mxu0 0.0
    %1732 = vmatpush1.msra.mxu0 %v1709
    %1733 = vmatprep.subr.mxu0 0.0
    %1734 = vmatpush1.msra.mxu0 %v1708
    %1735 = vmatprep.subr.mxu0 0.0
    %1736 = vmatpush1.msra.mxu0 %v1707
    %1737 = vmatprep.subr.mxu0 0.0
    %1738 = vmatpush1.msra.mxu0 %v1706
    %1739 = vmatprep.subr.mxu0 0.0
    %1740 = vmatpush1.msra.mxu0 %v1705
    %1741 = vmatprep.subr.mxu0 0.0
    %1742 = vmatpush1.msra.mxu0 %v1704
    %1743 = vmatprep.subr.mxu0 0.0
    %1744 = vmatpush1.msra.mxu0 %v1703
    %1745 = vmatprep.subr.mxu0 0.0
    %1746 = vmatpush1.msra.mxu0 %v1702
    %1747 = vmatprep.subr.mxu0 0.0
    %1748 = vmatpush1.msra.mxu0 %v1701
    %1749 = vmatprep.subr.mxu0 0.0
    %1750 = vmatpush1.msra.mxu0 %v1700
    %1751 = vmatprep.subr.mxu0 0.0
    %1752 = vmatpush1.msra.mxu0 %v1699
    %1753 = vmatprep.subr.mxu0 0.0
    %1754 = vmatpush1.msra.mxu0 %v1698
    %1755 = vmatprep.subr.mxu0 0.0
    %1756 = vmatpush2.msra.mxu0 0.0
    %1757 = vmatprep.subr.mxu0 0.0
    %1758 = vmatpush2.msra.mxu0 0.0
    %1759 = vmatprep.subr.mxu0 0.0
    %1760 = vmatpush2.msra.mxu0 0.0
    %1761 = vmatprep.subr.mxu0 0.0
    %1762 = vmatpush2.msra.mxu0 0.0
    %1763 = vmatprep.subr.mxu0 0.0
    %1764 = vmatpush2.msra.mxu0 0.0
    %1765 = vmatprep.subr.mxu0 0.0
    %1766 = vmatpush2.msra.mxu0 0.0
    %1767 = vmatprep.subr.mxu0 0.0
    %1768 = vmatpush2.msra.mxu0 0.0
    %1769 = vmatprep.subr.mxu0 0.0
    %1770 = vmatpush2.msra.mxu0 0.0
    %1771 = vmatprep.subr.mxu0 0.0
    %1772 = vmatpush2.msra.mxu0 0.0
    %1773 = vmatprep.subr.mxu0 0.0
    %1774 = vmatpush2.msra.mxu0 0.0
    %1775 = vmatprep.subr.mxu0 0.0
    %1776 = vmatpush2.msra.mxu0 0.0
    %1777 = vmatprep.subr.mxu0 0.0
    %1778 = vmatpush2.msra.mxu0 0.0
    %1779 = vmatprep.subr.mxu0 0.0
    %1780 = vmatpush2.msra.mxu0 0.0
    %1781 = vmatprep.subr.mxu0 0.0
    %1782 = vmatpush2.msra.mxu0 0.0
    %1783 = vmatprep.subr.mxu0 0.0
    %1784 = vmatpush2.msra.mxu0 0.0
    %1785 = vmatprep.subr.mxu0 0.0
    %1786 = vmatpush2.msra.mxu0 0.0
    %1787 = vmatprep.mubr.f32.mxu0 0.0
    %1788 = vmatmul.mubr.f32.gmra.mxu0 %v1718
    %v1789 = vpop.f32.mrf.mxu0
    %v1790 = vadd.f32 %v1714, %v1789
    %v1791 = vpop.f32.mrf.mxu0
    %1792 = vmatprep.mubr.f32.mxu0 0.0
    %1793 = vmatmul.mubr.f32.gmra.mxu0 %v1721
    %v1794 = vpop.f32.mrf.mxu0
    %v1795 = vadd.f32 %v1714, %v1794
    %v1796 = vpop.f32.mrf.mxu0
    %1797 = vdwg.mxu0
    %v1798 = vmax.f32 %v1790, 0.0
    %v1799 = vmax.f32 %v1795, 0.0
    %v1800 = vld [vmem:[%s12] sm:$0x1]
    %v1801 = vrot.slane %v1798, 7
    %v1802 = vrot.slane %v1799, 7
    %v1803 = vsel %vm1647, %v1801, %v1802
    %v1804 = vsel %vm1647, %v1802, %v1801
    %v1805 = vmul.f32 %v1804, %v1653
    %v1806 = vmul.f32 %v1803, %v1658
    %v1807 = vrot.slane %v1798, 1
    %v1808 = vrot.slane %v1799, 1
    %v1809 = vsel %vm1664, %v1807, %v1808
    %v1810 = vsel %vm1664, %v1808, %v1807
    %v1811 = vmul.f32 %v1809, %v1669
    %v1812 = vmul.f32 %v1810, %v1673
    %1815 = vrot.lane.b32.xlu0 %v1798, 64
    %v1816 = vpop.permute.xlu0 %1815
    %1817 = vrot.lane.b32.xlu0 %v1799, 64
    %v1818 = vpop.permute.xlu0 %1817
    %v1821 = vsel %vm1695, %v1805, %v1816
    %v1822 = vsel %vm1695, %v1806, %v1818
    %v1823 = vld [vmem:[%s11] sm:$0xff]
    %v1824 = vld [vmem:[%s11 + $0x8] sm:$0xff]
    %v1825 = vld [vmem:[%s11 + $0x10] sm:$0xff]
    %v1826 = vld [vmem:[%s11 + $0x18] sm:$0xff]
    %v1827 = vld [vmem:[%s11 + $0x20] sm:$0xff]
    %v1828 = vld [vmem:[%s11 + $0x28] sm:$0xff]
    %v1829 = vld [vmem:[%s11 + $0x30] sm:$0xff]
    %v1830 = vld [vmem:[%s11 + $0x38] sm:$0xff]
    %v1831 = vld [vmem:[%s11 + $0x40] sm:$0xff]
    %v1832 = vld [vmem:[%s11 + $0x48] sm:$0xff]
    %v1833 = vld [vmem:[%s11 + $0x50] sm:$0xff]
    %v1834 = vld [vmem:[%s11 + $0x58] sm:$0xff]
    %v1835 = vld [vmem:[%s11 + $0x60] sm:$0xff]
    %v1836 = vld [vmem:[%s11 + $0x68] sm:$0xff]
    %v1837 = vld [vmem:[%s11 + $0x70] sm:$0xff]
    %v1838 = vld [vmem:[%s11 + $0x78] sm:$0xff]
    %v1839 = vld [vmem:[%s11 + $0x80] sm:$0xff]
    %v1840 = vld [vmem:[%s11 + $0x88] sm:$0xff]
    %v1841 = vld [vmem:[%s11 + $0x90] sm:$0xff]
    %v1842 = vld [vmem:[%s11 + $0x98] sm:$0xff]
    %v1843 = vld [vmem:[%s11 + $0xa0] sm:$0xff]
    %v1844 = vld [vmem:[%s11 + $0xa8] sm:$0xff]
    %v1845 = vld [vmem:[%s11 + $0xb0] sm:$0xff]
    %v1846 = vld [vmem:[%s11 + $0xb8] sm:$0xff]
    %v1848 = vlaneseq
    %v1849 = vshrl.u32 %v1848, 7
    %v1850 = vsub.s32 0, %v1849
    %v1851 = vrot.slane %v1800, %v1850
    %v1854 = vsel %vm1695, %v1811, 0
    %v1857 = vsel %vm1695, %v1812, 0
    %1859 = vmatprep.subr.mxu0 0.0
    %1860 = vmatpush1.msra.mxu0 %v1838
    %1861 = vmatprep.subr.mxu0 0.0
    %1862 = vmatpush1.msra.mxu0 %v1837
    %1863 = vmatprep.subr.mxu0 0.0
    %1864 = vmatpush1.msra.mxu0 %v1836
    %1865 = vmatprep.subr.mxu0 0.0
    %1866 = vmatpush1.msra.mxu0 %v1835
    %1867 = vmatprep.subr.mxu0 0.0
    %1868 = vmatpush1.msra.mxu0 %v1834
    %1869 = vmatprep.subr.mxu0 0.0
    %1870 = vmatpush1.msra.mxu0 %v1833
    %1871 = vmatprep.subr.mxu0 0.0
    %1872 = vmatpush1.msra.mxu0 %v1832
    %1873 = vmatprep.subr.mxu0 0.0
    %1874 = vmatpush1.msra.mxu0 %v1831
    %1875 = vmatprep.subr.mxu0 0.0
    %1876 = vmatpush1.msra.mxu0 %v1830
    %1877 = vmatprep.subr.mxu0 0.0
    %1878 = vmatpush1.msra.mxu0 %v1829
    %1879 = vmatprep.subr.mxu0 0.0
    %1880 = vmatpush1.msra.mxu0 %v1828
    %1881 = vmatprep.subr.mxu0 0.0
    %1882 = vmatpush1.msra.mxu0 %v1827
    %1883 = vmatprep.subr.mxu0 0.0
    %1884 = vmatpush1.msra.mxu0 %v1826
    %1885 = vmatprep.subr.mxu0 0.0
    %1886 = vmatpush1.msra.mxu0 %v1825
    %1887 = vmatprep.subr.mxu0 0.0
    %1888 = vmatpush1.msra.mxu0 %v1824
    %1889 = vmatprep.subr.mxu0 0.0
    %1890 = vmatpush1.msra.mxu0 %v1823
    %1891 = vmatprep.subr.mxu0 0.0
    %1892 = vmatpush2.msra.mxu0 0.0
    %1893 = vmatprep.subr.mxu0 0.0
    %1894 = vmatpush2.msra.mxu0 0.0
    %1895 = vmatprep.subr.mxu0 0.0
    %1896 = vmatpush2.msra.mxu0 0.0
    %1897 = vmatprep.subr.mxu0 0.0
    %1898 = vmatpush2.msra.mxu0 0.0
    %1899 = vmatprep.subr.mxu0 0.0
    %1900 = vmatpush2.msra.mxu0 0.0
    %1901 = vmatprep.subr.mxu0 0.0
    %1902 = vmatpush2.msra.mxu0 0.0
    %1903 = vmatprep.subr.mxu0 0.0
    %1904 = vmatpush2.msra.mxu0 0.0
    %1905 = vmatprep.subr.mxu0 0.0
    %1906 = vmatpush2.msra.mxu0 0.0
    %1907 = vmatprep.subr.mxu0 0.0
    %1908 = vmatpush2.msra.mxu0 %v1846
    %1909 = vmatprep.subr.mxu0 0.0
    %1910 = vmatpush2.msra.mxu0 %v1845
    %1911 = vmatprep.subr.mxu0 0.0
    %1912 = vmatpush2.msra.mxu0 %v1844
    %1913 = vmatprep.subr.mxu0 0.0
    %1914 = vmatpush2.msra.mxu0 %v1843
    %1915 = vmatprep.subr.mxu0 0.0
    %1916 = vmatpush2.msra.mxu0 %v1842
    %1917 = vmatprep.subr.mxu0 0.0
    %1918 = vmatpush2.msra.mxu0 %v1841
    %1919 = vmatprep.subr.mxu0 0.0
    %1920 = vmatpush2.msra.mxu0 %v1840
    %1921 = vmatprep.subr.mxu0 0.0
    %1922 = vmatpush2.msra.mxu0 %v1839
    %1923 = vmatprep.mubr.f32.mxu0 %v1854
    %1924 = vmatmul.mubr.f32.gmra.mxu0 %v1821
    %v1925 = vpop.f32.mrf.mxu0
    %v1926 = vadd.f32 %v1851, %v1925
    %v1927 = vpop.f32.mrf.mxu0
    %1928 = vmatprep.mubr.f32.mxu0 %v1857
    %1929 = vmatmul.mubr.f32.gmra.mxu0 %v1822
    %v1930 = vpop.f32.mrf.mxu0
    %v1931 = vadd.f32 %v1851, %v1930
    %v1932 = vpop.f32.mrf.mxu0
    %1933 = vdwg.mxu0
    %v1934 = vadd.f32 %v1638, %v1926
    %v1935 = vadd.f32 %v1639, %v1931
    %v1936 = vsel %vm60, %v1934, 0.0
    %1937 = vadd.xlane.f32.xlu0 %v1936
    %v1938 = vpop.xlane.xlu0 %1937
    %v1939 = vsel %vm60, %v1935, 0.0
    %1940 = vadd.xlane.f32.xlu0 %v1939
    %v1941 = vpop.xlane.xlu0 %1940
    %v1942 = vmul.f32 %v1938, %v1601
    %v1943 = vmul.f32 %v1941, %v1601
    %v1944 = vsub.f32 %v1934, %v1942
    %v1945 = vsub.f32 %v1935, %v1943
    %v1946 = vmul.f32 %v1944, %v1944
    %v1947 = vmul.f32 %v1945, %v1945
    %v1948 = vsel %vm60, %v1946, 0.0
    %1949 = vadd.xlane.f32.xlu0 %v1948
    %v1950 = vpop.xlane.xlu0 %1949
    %v1951 = vsel %vm60, %v1947, 0.0
    %1952 = vadd.xlane.f32.xlu0 %v1951
    %v1953 = vpop.xlane.xlu0 %1952
    %v1954 = vmul.f32 %v1950, %v1601
    %v1955 = vmul.f32 %v1953, %v1601
    %v1956 = vadd.f32 %v1954, 1e-05
    %v1957 = vadd.f32 %v1955, 1e-05
    %v1958 = vrsqrt.pop %v1956
    %v1959 = vrsqrt.pop %v1957
    %v1960 = vmul.f32 %v1944, %v1958
    %v1961 = vmul.f32 %v1945, %v1959
    %v1962 = vadd.f32 %v47, 1.0
    %v1963 = vadd.f32 %v48, 1.0
    %v1964 = vmul.f32 %v1960, %v1962
    %v1965 = vmul.f32 %v1961, %v1963
    %1968 = vrot.lane.b32.xlu0 %v47, 96
    %v1969 = vpop.permute.xlu0 %1968
    %1970 = vrot.lane.b32.xlu0 %v48, 96
    %v1971 = vpop.permute.xlu0 %1970
    %v1974 = vadd.f32 %v1964, %v1969
    %v1975 = vadd.f32 %v1965, %v1971
    %1976 = vst.msk [vmem:[#allocation2] sm:$0xff] %vm60, %v1974
    %1977 = vst.msk [vmem:[#allocation2 + $0x8] sm:$0xff] %vm60, %v1975
    // Predicated region
    $region54: #{tpu_custom_call.1} parent=1 // pred_check
      _
    $region55: #{tpu_custom_call.1} parent=1 // pred_check_branch
      %1979 = sbr.rel (0) target = $region57
    $region56: #{tpu_custom_call.1} parent=1 // pred_region
      %s1981 = ssub.s32 256, 256
      %1982 = vsyncadd [#allocation3], %s1981
      %s1983 = sshll.u32 [#allocation2], 4
      %s1984 = int_to_ptr.vmem [resolvable:$true] %s1983
      %1989 = dma.vmem_to_hbm [thread:$0]  %s1984, 256, %s13, [#allocation3], 128, 128, 8
    $region57: #{tpu_custom_call.1} parent=1 // pred_fallthru
      _
    // Predicated region
    $region58: #{tpu_custom_call.1} parent=1 // pred_check
      _
    $region59: #{tpu_custom_call.1} parent=1 // pred_check_branch
      %1991 = sbr.rel (0) target = $region61
    $region60: #{tpu_custom_call.1} parent=1 // pred_region
      %1992 = dma.done [#allocation3], 256
    $region61: #{tpu_custom_call.1} parent=1 // pred_fallthru
      _
    %1993 = vsyncpa [#allocation3], 1

</llo_original>
